<compile_context>
chip_gen: v7x
topology: tpu7x:2x2x1
jax: 0.10.0
libtpu: 0.0.40
codegen_flags: <defaults>
</compile_context>

<pallas_src>
import math
from functools import partial

import jax
import jax.numpy as jnp
from jax import lax
from jax.experimental import pallas as pl
from jax.experimental.pallas import tpu as pltpu


# ----------------------------------------------------------------------------
# small helpers
# ----------------------------------------------------------------------------

def _pick_tile(n, cands=(1024, 512, 256, 128, 64, 32, 16, 8)):
    for c in cands:
        if n % c == 0:
            return c
    return n


def _sigmoid(x):
    return 1.0 / (1.0 + jnp.exp(-x))


def _cparams(semantics, est_bytes):
    # Scoped-VMEM budget: estimate * headroom, clamped to [32 MiB, 64 MiB]
    # (64 MiB = v7x physical; 32 MiB >= every chip's default scoped limit).
    limit = int(min(64 * 1024 * 1024, max(32 * 1024 * 1024, int(est_bytes) * 2)))
    return pltpu.CompilerParams(dimension_semantics=semantics,
                                vmem_limit_bytes=limit)


def _group_norm_silu(xf, gamma, beta, groups, eps, apply_silu):
    """xf: (1,H,W,C) f32; gamma/beta: (1,C) f32.  Shifted two-pass stats."""
    _, H, W, C = xf.shape
    cg = C // groups
    n = float(H * W * cg)
    xs = xf.reshape(H * W, C)
    s1 = jnp.sum(xs, axis=0, keepdims=True)                       # (1, C)
    if cg == 1:
        mean_c = s1 / n
    else:
        gmean = jnp.sum(s1.reshape(groups, cg), axis=1, keepdims=True) / n
        mean_c = jnp.broadcast_to(gmean, (groups, cg)).reshape(1, C)
    xc = xs - mean_c
    s2 = jnp.sum(xc * xc, axis=0, keepdims=True)                  # (1, C)
    if cg == 1:
        var_c = s2 / n
    else:
        gvar = jnp.sum(s2.reshape(groups, cg), axis=1, keepdims=True) / n
        var_c = jnp.broadcast_to(gvar, (groups, cg)).reshape(1, C)
    y = xc * lax.rsqrt(var_c + eps) * gamma + beta
    if apply_silu:
        y = y * _sigmoid(y)
    return y.reshape(1, H, W, C)


# ----------------------------------------------------------------------------
# fused [concat] + group-norm(+SiLU) + 3x3 conv (stride 1/2) + epilogue kernel
# ----------------------------------------------------------------------------

def _gn_conv_kernel(*refs, gn, gn_silu, stride, add_emb, res_mode, two_in,
                    res_two, groups, eps):
    it = iter(refs)
    x_ref = next(it)
    x2_ref = next(it) if two_in else None
    g_ref = next(it) if gn else None
    bt_ref = next(it) if gn else None
    w_ref = next(it)                       # (9*Cin, Cout) bf16
    b_ref = next(it)                       # (1, Cout) f32
    emb_ref = next(it) if add_emb else None
    res_ref = next(it) if res_mode != 'none' else None
    res2_ref = next(it) if res_two else None
    sw_ref = next(it) if res_mode == 'conv1x1' else None
    sb_ref = next(it) if res_mode == 'conv1x1' else None
    out_ref = next(it)

    _, Ho, Wo, Cout = out_ref.shape

    if two_in or gn:
        xf = x_ref[...].astype(jnp.float32)
        if two_in:
            xf = jnp.concatenate([xf, x2_ref[...].astype(jnp.float32)], axis=-1)
        if gn:
            xf = _group_norm_silu(xf, g_ref[...].astype(jnp.float32),
                                  bt_ref[...].astype(jnp.float32),
                                  groups, eps, gn_silu)
        xb = xf.astype(jnp.bfloat16)       # MXU operand only
    else:
        xb = x_ref[...].astype(jnp.bfloat16)

    b1, H, W, Cin = xb.shape

    # zero pad H and W by 1 in VMEM (bf16)
    zr = jnp.zeros((b1, 1, W, Cin), jnp.bfloat16)
    xp = jnp.concatenate([zr, xb, zr], axis=1)
    zc = jnp.zeros((b1, H + 2, 1, Cin), jnp.bfloat16)
    xp = jnp.concatenate([zc, xp, zc], axis=2)          # (1, H+2, W+2, Cin)

    if stride == 2:
        # phase split over sublane dims (no lane repack)
        xpr = xp.reshape(b1, (H + 2) // 2, 2, (W + 2) // 2, 2, Cin)
        phase = [[xpr[:, :, pa, :, pb, :] for pb in range(2)] for pa in range(2)]

    # 9 accumulated MXU dots: no im2col materialization.
    acc = jnp.zeros((Ho * Wo, Cout), jnp.float32)
    for ky in range(3):
        for kx in range(3):
            if stride == 1:
                tap = xp[:, ky:ky + Ho, kx:kx + Wo, :]
            else:
                tap = phase[ky % 2][kx % 2][:, ky // 2:ky // 2 + Ho,
                                            kx // 2:kx // 2 + Wo, :]
            t2 = tap.reshape(Ho * Wo, Cin)
            wk = w_ref[(ky * 3 + kx) * Cin:(ky * 3 + kx + 1) * Cin, :]
            acc = acc + jnp.dot(t2, wk, preferred_element_type=jnp.float32)

    acc = acc + b_ref[...]
    if add_emb:
        acc = acc + emb_ref[...].reshape(1, Cout)
    if res_mode == 'identity':
        acc = acc + res_ref[...].astype(jnp.float32).reshape(Ho * Wo, Cout)
    elif res_mode == 'conv1x1':
        c1 = res_ref.shape[-1]
        r1 = res_ref[...].astype(jnp.bfloat16).reshape(Ho * Wo, c1)
        acc = acc + jnp.dot(r1, sw_ref[0:c1, :], preferred_element_type=jnp.float32)
        if res_two:
            c2 = res2_ref.shape[-1]
            r2 = res2_ref[...].astype(jnp.bfloat16).reshape(Ho * Wo, c2)
            acc = acc + jnp.dot(r2, sw_ref[c1:c1 + c2, :],
                                preferred_element_type=jnp.float32)
        acc = acc + sb_ref[...]
    out_ref[...] = acc.reshape(1, Ho, Wo, Cout).astype(out_ref.dtype)


def conv3x3_fused(x, w, b, *, x2=None, gn=None, gn_silu=True, stride=1,
                  emb=None, res=None, skip=None, groups=32, eps=1e-5):
    """x: (B,H,W,C1) NHWC; x2 optional (B,H,W,C2) concatenated along channels
    in-VMEM (decoder skip-concat fusion).  w: (9*(C1+C2), Cout) bf16; b: (Cout,).
    gn: {'g','b'} group-norm over the (concatenated) input first (+SiLU).
    emb: (B,Cout) broadcast-added.  res: residual tensor or (res1,res2) pair;
    skip: optional 1x1 conv {'w': (Cres,Cout) bf16, 'b': (Cout,)} on res."""
    assert stride in (1, 2)
    B, H, W, C1 = x.shape
    assert H % stride == 0 and W % stride == 0
    C2 = 0 if x2 is None else x2.shape[-1]
    Cin = C1 + C2
    Cout = w.shape[-1]
    Ho, Wo = H // stride, W // stride

    res_list = ()
    if res is not None:
        res_list = tuple(res) if isinstance(res, (tuple, list)) else (res,)
    res_mode = 'none'
    if res_list:
        res_mode = 'conv1x1' if skip is not None else 'identity'
    res_two = len(res_list) == 2

    const = dict(pipeline_mode=pl.Buffered(1))     # constant-index operands
    in_specs = [pl.BlockSpec((1, H, W, C1), lambda i: (i, 0, 0, 0))]
    args = [x]
    if x2 is not None:
        in_specs.append(pl.BlockSpec((1, H, W, C2), lambda i: (i, 0, 0, 0)))
        args.append(x2)
    if gn is not None:
        in_specs += [pl.BlockSpec((1, Cin), lambda i: (0, 0), **const),
                     pl.BlockSpec((1, Cin), lambda i: (0, 0), **const)]
        args += [gn['g'].reshape(1, Cin), gn['b'].reshape(1, Cin)]
    in_specs += [pl.BlockSpec((9 * Cin, Cout), lambda i: (0, 0), **const),
                 pl.BlockSpec((1, Cout), lambda i: (0, 0), **const)]
    args += [w, b.reshape(1, Cout)]
    if emb is not None:
        in_specs.append(pl.BlockSpec((1, 1, Cout), lambda i: (i, 0, 0)))
        args.append(emb.reshape(B, 1, Cout))
    for r in res_list:
        in_specs.append(pl.BlockSpec((1, Ho, Wo, r.shape[-1]),
                                     lambda i: (i, 0, 0, 0)))
        args.append(r)
    if res_mode == 'conv1x1':
        crt = sum(r.shape[-1] for r in res_list)
        in_specs += [pl.BlockSpec((crt, Cout), lambda i: (0, 0), **const),
                     pl.BlockSpec((1, Cout), lambda i: (0, 0), **const)]
        args += [skip['w'], skip['b'].reshape(1, Cout)]

    est = (2 * H * W * Cin * 4                     # input block(s), double buffer
           + (H + 2) * (W + 2) * Cin * 2           # padded bf16 plane
           + H * W * Cin * 4                       # GN temporary
           + 3 * Ho * Wo * Cout * 4                # accumulator + epilogue temps
           + 2 * Ho * Wo * Cout * 4                # output double buffer
           + 9 * Cin * Cout * 2 + 4 * Cout * 4)
    for r in res_list:
        est += 2 * Ho * Wo * r.shape[-1] * 4

    kernel = partial(_gn_conv_kernel, gn=gn is not None, gn_silu=gn_silu,
                     stride=stride, add_emb=emb is not None, res_mode=res_mode,
                     two_in=x2 is not None, res_two=res_two, groups=groups,
                     eps=eps)
    return pl.pallas_call(
        kernel,
        grid=(B,),
        in_specs=in_specs,
        out_specs=pl.BlockSpec((1, Ho, Wo, Cout), lambda i: (i, 0, 0, 0)),
        out_shape=jax.ShapeDtypeStruct((B, Ho, Wo, Cout), x.dtype),
        compiler_params=_cparams(("parallel",), est),
    )(*args)


# ----------------------------------------------------------------------------
# nearest-2x-upsample + 3x3 conv as 4 output-phase convs on original resolution
# ----------------------------------------------------------------------------

# tap offsets (dy, dx) per output phase (a, b) with a, b in {0, 1}
_UP_OFFSETS = []
for _a in (0, 1):
    for _b in (0, 1):
        _UP_OFFSETS.append([(dy, dx)
                            for dy in ((-1, 0) if _a == 0 else (0, 1))
                            for dx in ((-1, 0) if _b == 0 else (0, 1))])


def upsample_phase_weights(w):
    """w: (3,3,Cin,Cout) f32 -> (16*Cin, Cout) bf16 phase-major combined weights."""
    Cin, Cout = w.shape[2], w.shape[3]
    mats = []
    for p, (a, b) in enumerate(((0, 0), (0, 1), (1, 0), (1, 1))):
        for (dy, dx) in _UP_OFFSETS[p]:
            m = jnp.zeros((Cin, Cout), jnp.float32)
            for ky in range(3):
                for kx in range(3):
                    if (a + ky - 1) // 2 == dy and (b + kx - 1) // 2 == dx:
                        m = m + w[ky, kx]
            mats.append(m)
    return jnp.concatenate(mats, axis=0).astype(jnp.bfloat16)


def _upsample_conv_kernel(x_ref, w_ref, b_ref, o_ref):
    xb = x_ref[...].astype(jnp.bfloat16)           # (1, H, W, Cin)
    b1, H, W, Cin = xb.shape
    Cout = o_ref.shape[-1]

    zr = jnp.zeros((b1, 1, W, Cin), jnp.bfloat16)
    xp = jnp.concatenate([zr, xb, zr], axis=1)
    zc = jnp.zeros((b1, H + 2, 1, Cin), jnp.bfloat16)
    xp = jnp.concatenate([zc, xp, zc], axis=2)      # (1, H+2, W+2, Cin)

    bias = b_ref[...]
    phase_out = []
    for p in range(4):
        acc = jnp.zeros((H * W, Cout), jnp.float32)
        for t, (dy, dx) in enumerate(_UP_OFFSETS[p]):
            tap = xp[:, 1 + dy:1 + dy + H, 1 + dx:1 + dx + W, :].reshape(H * W, Cin)
            wk = w_ref[(p * 4 + t) * Cin:(p * 4 + t + 1) * Cin, :]
            acc = acc + jnp.dot(tap, wk, preferred_element_type=jnp.float32)
        phase_out.append((acc + bias).reshape(H, W, Cout))

    p00, p01, p10, p11 = phase_out                  # interleave phases
    row0 = jnp.concatenate([p00[:, :, None, :], p01[:, :, None, :]], axis=2)
    row1 = jnp.concatenate([p10[:, :, None, :], p11[:, :, None, :]], axis=2)
    full = jnp.concatenate([row0[:, None], row1[:, None]], axis=1)  # (H,2,W,2,C)
    o_ref[...] = full.reshape(1, 2 * H, 2 * W, Cout).astype(o_ref.dtype)


def upsample_conv(x, w_up, b):
    B, H, W, Cin = x.shape
    Cout = w_up.shape[-1]
    est = (2 * H * W * Cin * 4 + (H + 2) * (W + 2) * Cin * 2
           + 5 * H * W * Cout * 4 + 2 * 4 * H * W * Cout * 4
           + 16 * Cin * Cout * 2)
    return pl.pallas_call(
        _upsample_conv_kernel,
        grid=(B,),
        in_specs=[pl.BlockSpec((1, H, W, Cin), lambda i: (i, 0, 0, 0)),
                  pl.BlockSpec((16 * Cin, Cout), lambda i: (0, 0),
                               pipeline_mode=pl.Buffered(1)),
                  pl.BlockSpec((1, Cout), lambda i: (0, 0),
                               pipeline_mode=pl.Buffered(1))],
        out_specs=pl.BlockSpec((1, 2 * H, 2 * W, Cout), lambda i: (i, 0, 0, 0)),
        out_shape=jax.ShapeDtypeStruct((B, 2 * H, 2 * W, Cout), x.dtype),
        compiler_params=_cparams(("parallel",), est),
    )(x, w_up, b.reshape(1, Cout))


# ----------------------------------------------------------------------------
# standalone group-norm kernel (AttentionBlock pre-norm, no SiLU)
# ----------------------------------------------------------------------------

def _groupnorm_kernel(x_ref, g_ref, b_ref, o_ref, *, groups, eps, apply_silu):
    y = _group_norm_silu(x_ref[...].astype(jnp.float32),
                         g_ref[...].astype(jnp.float32),
                         b_ref[...].astype(jnp.float32),
                         groups, eps, apply_silu)
    o_ref[...] = y.astype(o_ref.dtype)


def group_norm(x, gamma, beta, groups=32, eps=1e-5, silu=False):
    B, H, W, C = x.shape
    est = 5 * H * W * C * 4
    return pl.pallas_call(
        partial(_groupnorm_kernel, groups=groups, eps=eps, apply_silu=silu),
        grid=(B,),
        in_specs=[pl.BlockSpec((1, H, W, C), lambda i: (i, 0, 0, 0)),
                  pl.BlockSpec((1, C), lambda i: (0, 0),
                               pipeline_mode=pl.Buffered(1)),
                  pl.BlockSpec((1, C), lambda i: (0, 0),
                               pipeline_mode=pl.Buffered(1))],
        out_specs=pl.BlockSpec((1, H, W, C), lambda i: (i, 0, 0, 0)),
        out_shape=jax.ShapeDtypeStruct(x.shape, x.dtype),
        compiler_params=_cparams(("parallel",), est),
    )(x, gamma.reshape(1, C), beta.reshape(1, C))


# ----------------------------------------------------------------------------
# fused matmul kernel: (optional input SiLU) x @ w + b (+ residual)
# ----------------------------------------------------------------------------

def _matmul_kernel(*refs, silu_in, add_res):
    it = iter(refs)
    x_ref = next(it)
    w_ref = next(it)                     # bf16
    b_ref = next(it)                     # (1, N) f32
    res_ref = next(it) if add_res else None
    o_ref = next(it)

    if silu_in:
        x = x_ref[...].astype(jnp.float32)
        x = (x * _sigmoid(x)).astype(jnp.bfloat16)
    else:
        x = x_ref[...].astype(jnp.bfloat16)
    acc = jnp.dot(x, w_ref[...], preferred_element_type=jnp.float32)
    acc = acc + b_ref[...]
    if add_res:
        acc = acc + res_ref[...].astype(jnp.float32)
    o_ref[...] = acc.astype(o_ref.dtype)


def matmul_fused(x, w, b, res=None, silu_in=False):
    M, K = x.shape
    N = w.shape[1]
    tm = _pick_tile(M)
    const = dict(pipeline_mode=pl.Buffered(1))
    in_specs = [pl.BlockSpec((tm, K), lambda i: (i, 0)),
                pl.BlockSpec((K, N), lambda i: (0, 0), **const),
                pl.BlockSpec((1, N), lambda i: (0, 0), **const)]
    args = [x, w, b.reshape(1, N)]
    if res is not None:
        in_specs.append(pl.BlockSpec((tm, N), lambda i: (i, 0)))
        args.append(res)
    est = (2 * tm * K * 4 + K * N * 2 + N * 4 + 3 * tm * N * 4
           + (2 * tm * N * 4 if res is not None else 0))
    return pl.pallas_call(
        partial(_matmul_kernel, silu_in=silu_in, add_res=res is not None),
        grid=(M // tm,),
        in_specs=in_specs,
        out_specs=pl.BlockSpec((tm, N), lambda i: (i, 0)),
        out_shape=jax.ShapeDtypeStruct((M, N), x.dtype),
        compiler_params=_cparams(("parallel",), est),
    )(*args)


# ----------------------------------------------------------------------------
# flash-style attention (QKVAttentionLegacy semantics, heads inside the kernel,
# q/k/v read directly from the (B, T, 3C) qkv tensor, lane-dense output)
# ----------------------------------------------------------------------------

def _flash_attn_kernel(q_ref, kv_ref, o_ref, m_ref, l_ref, acc_ref, *, nh, dh):
    ki = pl.program_id(2)

    @pl.when(ki == 0)
    def _init():
        m_ref[...] = jnp.full(m_ref.shape, -jnp.inf, jnp.float32)
        l_ref[...] = jnp.zeros(l_ref.shape, jnp.float32)
        acc_ref[...] = jnp.zeros(acc_ref.shape, jnp.float32)

    qblk = q_ref[0]       # (tq, 3C), activation dtype
    kvblk = kv_ref[0]     # (tk, 3C)

    for hh in range(nh):  # static unroll over heads
        base = 3 * dh * hh
        q = qblk[:, base:base + dh].astype(jnp.bfloat16)
        k = kvblk[:, base + dh:base + 2 * dh].astype(jnp.bfloat16)
        v = kvblk[:, base + 2 * dh:base + 3 * dh].astype(jnp.bfloat16)

        s = lax.dot_general(q, k, (((1,), (1,)), ((), ())),
                            preferred_element_type=jnp.float32)   # (tq, tk)
        m_prev = m_ref[:, hh:hh + 1]
        m_new = jnp.maximum(m_prev, jnp.max(s, axis=-1, keepdims=True))
        alpha = jnp.exp(m_prev - m_new)
        p = jnp.exp(s - m_new)
        l_ref[:, hh:hh + 1] = alpha * l_ref[:, hh:hh + 1] + \
            jnp.sum(p, axis=-1, keepdims=True)
        acc_ref[:, hh * dh:(hh + 1) * dh] = (
            alpha * acc_ref[:, hh * dh:(hh + 1) * dh]
            + jnp.dot(p.astype(jnp.bfloat16), v,
                      preferred_element_type=jnp.float32))
        m_ref[:, hh:hh + 1] = m_new

    @pl.when(ki == pl.num_programs(2) - 1)
    def _done():
        cols = []
        for hh in range(nh):
            inv = pl.reciprocal(l_ref[:, hh:hh + 1], approx=True)
            cols.append(acc_ref[:, hh * dh:(hh + 1) * dh] * inv)
        o_ref[...] = jnp.concatenate(cols, axis=-1)[None].astype(o_ref.dtype)


def flash_attention(qkv, num_heads):
    """qkv: (B, T, 3C), per-head channel layout [q(dh), k(dh), v(dh)].
    The legacy attention scale is folded into the qkv projection weights."""
    B, T, C3 = qkv.shape
    C = C3 // 3
    dh = C // num_heads
    tq = _pick_tile(T, (256, 128, 64, 32, 16, 8))
    tk = tq
    est = (2 * tq * C3 * 4 + 2 * tk * C3 * 4 + 2 * tq * C * 4
           + tq * (2 * num_heads + C) * 4 + 4 * tq * tk * 4)
    return pl.pallas_call(
        partial(_flash_attn_kernel, nh=num_heads, dh=dh),
        grid=(B, T // tq, T // tk),
        in_specs=[
            pl.BlockSpec((1, tq, C3), lambda b, qi, ki: (b, qi, 0)),
            pl.BlockSpec((1, tk, C3), lambda b, qi, ki: (b, ki, 0)),
        ],
        out_specs=pl.BlockSpec((1, tq, C), lambda b, qi, ki: (b, qi, 0)),
        out_shape=jax.ShapeDtypeStruct((B, T, C), qkv.dtype),
        scratch_shapes=[pltpu.VMEM((tq, num_heads), jnp.float32),
                        pltpu.VMEM((tq, num_heads), jnp.float32),
                        pltpu.VMEM((tq, C), jnp.float32)],
        compiler_params=_cparams(("parallel", "parallel", "arbitrary"), est),
    )(qkv, qkv)


# ----------------------------------------------------------------------------
# Deterministic synthetic parameter initialization (shapes from __init__)
# ----------------------------------------------------------------------------

class KeyGen:
    def __init__(self, key):
        self._key = key

    def __call__(self):
        self._key, sub = jax.random.split(self._key)
        return sub


def _init_w(kg, shape, scale=0.05):
    return jax.random.normal(kg(), shape, jnp.float32) * scale


def make_linear(kg, cin, cout):
    return {'w': _init_w(kg, (cin, cout)).astype(jnp.bfloat16),
            'b': _init_w(kg, (cout,), 0.01)}


def make_conv3(kg, cin, cout, zero=False):
    if zero:  # zero_module(...) in the PyTorch __init__
        return {'w': jnp.zeros((9 * cin, cout), jnp.bfloat16),
                'b': jnp.zeros((cout,), jnp.float32)}
    w = _init_w(kg, (3, 3, cin, cout))
    return {'w': w.reshape(9 * cin, cout).astype(jnp.bfloat16),
            'b': _init_w(kg, (cout,), 0.01)}


def make_conv1(kg, cin, cout, zero=False):
    if zero:
        return {'w': jnp.zeros((cin, cout), jnp.bfloat16),
                'b': jnp.zeros((cout,), jnp.float32)}
    return {'w': _init_w(kg, (cin, cout)).astype(jnp.bfloat16),
            'b': _init_w(kg, (cout,), 0.01)}


def make_groupnorm(c):
    return {'g': jnp.ones((c,), jnp.float32), 'b': jnp.zeros((c,), jnp.float32)}


def make_resblock(kg, cin, emb_dim, cout):
    return {
        'type': 'res',
        'in_norm': make_groupnorm(cin),
        'in_conv': make_conv3(kg, cin, cout),
        'emb_lin': make_linear(kg, emb_dim, cout),
        'out_norm': make_groupnorm(cout),
        'out_conv': make_conv3(kg, cout, cout, zero=True),
        'skip': None if cin == cout else make_conv1(kg, cin, cout),
    }


def make_attnblock(kg, ch, num_heads):
    dh = ch // num_heads
    wq = _init_w(kg, (ch, 3 * ch))
    bq = _init_w(kg, (3 * ch,), 0.01)
    # Fold the legacy 1/sqrt(dh) attention scale into the q columns (zero cost).
    col = jnp.arange(3 * ch)
    scale = jnp.where((col % (3 * dh)) < dh, dh ** -0.5, 1.0).astype(jnp.float32)
    return {
        'type': 'attn',
        'num_heads': num_heads,
        'norm': make_groupnorm(ch),
        'qkv': {'w': (wq * scale[None, :]).astype(jnp.bfloat16), 'b': bq * scale},
        'proj': make_conv1(kg, ch, ch, zero=True),
    }


def make_conv_layer(kg, cin, cout):
    return {'type': 'conv', 'conv': make_conv3(kg, cin, cout)}


def make_downsample(kg, ch, cout):
    return {'type': 'down', 'conv': make_conv3(kg, ch, cout)}


def make_upsample(kg, ch, cout):
    w = _init_w(kg, (3, 3, ch, cout))
    return {'type': 'up', 'w_up': upsample_phase_weights(w),
            'b': _init_w(kg, (cout,), 0.01)}


def init_controlnet_reference_only(key, *, image_size, in_channels,
                                   model_channels, hint_channels, out_channels,
                                   num_res_blocks, attention_resolutions,
                                   channel_mult=(1, 2), num_heads=4):
    del image_size, out_channels  # stored-only attributes in the PyTorch module
    kg = KeyGen(key)
    mc = model_channels
    ted = mc * 4
    nrb = ([num_res_blocks] * len(channel_mult)
           if isinstance(num_res_blocks, int) else list(num_res_blocks))

    params = {
        'model_channels': mc,
        'time_embed': [make_linear(kg, mc, ted), make_linear(kg, ted, ted)],
        'input_blocks': [[make_conv_layer(kg, in_channels, mc)]],
        'middle_block': [],
        'output_blocks': [],
    }
    # TODO(synk): input_hint_block params exist in __init__ but forward() never
    # calls it (hint is ignored), so they are not materialized here.
    del hint_channels

    input_block_chans = [mc]
    ch = mc
    ds = 1
    for level, mult in enumerate(channel_mult):
        for _ in range(nrb[level]):
            layers = [make_resblock(kg, ch, ted, mult * mc)]
            ch = mult * mc
            if ds in attention_resolutions:
                layers.append(make_attnblock(kg, ch, num_heads))
            params['input_blocks'].append(layers)
            input_block_chans.append(ch)
        if level != len(channel_mult) - 1:
            params['input_blocks'].append([make_downsample(kg, ch, ch)])
            input_block_chans.append(ch)
            ds *= 2

    params['middle_block'] = [
        make_resblock(kg, ch, ted, ch),
        make_attnblock(kg, ch, num_heads),
        make_resblock(kg, ch, ted, ch),
    ]

    for level, mult in list(enumerate(channel_mult))[::-1]:
        for i in range(nrb[level] + 1):
            ich = input_block_chans.pop()
            layers = [make_resblock(kg, ch + ich, ted, mc * mult)]
            ch = mc * mult
            if ds in attention_resolutions:
                layers.append(make_attnblock(kg, ch, num_heads))
            if level and i == nrb[level]:
                layers.append(make_upsample(kg, ch, ch))
                ds //= 2
            params['output_blocks'].append(layers)
    return params


# ----------------------------------------------------------------------------
# module application (glue in plain JAX; all hot math in the Pallas kernels)
# ----------------------------------------------------------------------------

def apply_resblock(p, h, emb, skip_feat=None):
    # in_layers(GN+SiLU+conv) + emb  |  out_layers(GN+SiLU+zero conv) + skip(x)
    # skip_feat (decoder skip tensor) is concatenated in-VMEM inside the kernels.
    emb_out = matmul_fused(emb, p['emb_lin']['w'], p['emb_lin']['b'],
                           silu_in=True)                       # (B, Cout)
    hh = conv3x3_fused(h, p['in_conv']['w'], p['in_conv']['b'], x2=skip_feat,
                       gn=p['in_norm'], gn_silu=True, emb=emb_out)
    res = h if skip_feat is None else (h, skip_feat)
    # dropout p=0.0 -> identity
    out = conv3x3_fused(hh, p['out_conv']['w'], p['out_conv']['b'],
                        gn=p['out_norm'], gn_silu=True,
                        res=res, skip=p['skip'])
    return out


def apply_attention(p, h, attention_bank=None, attention_mode=None, uc=False):
    # TODO(synk): reference-only attention-bank read/write path not implemented;
    # attention_bank=None reproduces the standard AttentionBlock path.
    del attention_bank, attention_mode, uc
    B, Hs, Ws, C = h.shape
    T = Hs * Ws
    xn = group_norm(h, p['norm']['g'], p['norm']['b'], silu=False)
    qkv = matmul_fused(xn.reshape(B * T, C), p['qkv']['w'], p['qkv']['b'])
    a = flash_attention(qkv.reshape(B, T, 3 * C), p['num_heads'])  # (B, T, C)
    out = matmul_fused(a.reshape(B * T, C), p['proj']['w'], p['proj']['b'],
                       res=h.reshape(B * T, C))                 # residual fused
    return out.reshape(B, Hs, Ws, C)


def apply_block(layers, h, emb, context, attention_bank, attention_mode, uc,
                skip_feat=None):
    del context  # no spatial transformer (use_spatial_transformer=False)
    for layer in layers:
        t = layer['type']
        if t == 'conv':
            h = conv3x3_fused(h, layer['conv']['w'], layer['conv']['b'])
        elif t == 'res':
            h = apply_resblock(layer, h, emb, skip_feat=skip_feat)
            skip_feat = None
        elif t == 'attn':
            h = apply_attention(layer, h, attention_bank, attention_mode, uc)
        elif t == 'down':
            h = conv3x3_fused(h, layer['conv']['w'], layer['conv']['b'], stride=2)
        elif t == 'up':
            h = upsample_conv(h, layer['w_up'], layer['b'])
    return h


def timestep_embedding(timesteps, dim, max_period=10000):
    half = dim // 2
    freqs = jnp.exp(-math.log(max_period)
                    * jnp.arange(half, dtype=jnp.float32) / half)
    args = timesteps.astype(jnp.float32)[:, None] * freqs[None]
    return jnp.concatenate([jnp.cos(args), jnp.sin(args)], axis=-1)


def controlnet_reference_only_forward(params, x, hint, timesteps, context,
                                      attention_bank=None, attention_mode=None,
                                      uc=False):
    """x is NCHW (PyTorch convention).  Returns (outs, h_final_NCHW); the
    PyTorch module returns only `outs`, which is always an empty list."""
    del hint  # unused by the PyTorch forward()
    mc = params['model_channels']
    hs = []

    t_emb = timestep_embedding(timesteps, mc)
    emb = matmul_fused(t_emb, params['time_embed'][0]['w'],
                       params['time_embed'][0]['b'])
    emb = matmul_fused(emb, params['time_embed'][1]['w'],
                       params['time_embed'][1]['b'], silu_in=True)

    h = jnp.transpose(x, (0, 2, 3, 1)).astype(jnp.float32)   # NCHW -> NHWC
    for layers in params['input_blocks']:
        h = apply_block(layers, h, emb, context, attention_bank,
                        attention_mode, uc)
        hs.append(h)
    h = apply_block(params['middle_block'], h, emb, context, attention_bank,
                    attention_mode, uc)
    for layers in params['output_blocks']:
        # torch.cat([h, hs.pop()], dim=1) fused into the consuming resblock
        # (in-VMEM channel concat + two K-sliced skip dots) -- no HBM round trip.
        h = apply_block(layers, h, emb, context, attention_bank,
                        attention_mode, uc, skip_feat=hs.pop())

    outs = []
    return outs, jnp.transpose(h, (0, 3, 1, 2))              # NHWC -> NCHW


# ----------------------------------------------------------------------------
# Demo + self-checks
# ----------------------------------------------------------------------------

if __name__ == "__main__":
    key = jax.random.PRNGKey(0)
    k_param, k_x, k_hint, k_ctx, k_chk = jax.random.split(key, 5)

    B, C_in, HW = 2, 4, 16
    model_channels = 32
    params = init_controlnet_reference_only(
        k_param, image_size=HW, in_channels=C_in,
        model_channels=model_channels, hint_channels=3, out_channels=C_in,
        num_res_blocks=1, attention_resolutions=(2,), channel_mult=(1, 2),
        num_heads=4)

    x = jax.random.normal(k_x, (B, C_in, HW, HW), jnp.float32)          # NCHW
    hint = jax.random.normal(k_hint, (B, 3, HW * 8, HW * 8), jnp.float32)
    timesteps = jnp.array([1.0, 500.0], jnp.float32)
    context = jax.random.normal(k_ctx, (B, 8, 32), jnp.float32)  # unused here

    # --- kernel self-checks against pure-JAX references (bf16 MXU operands) ---
    kc = KeyGen(k_chk)

    def conv_ref(xr, w_hwio, br, stride=1, upsample=False):
        xb = xr.astype(jnp.bfloat16).astype(jnp.float32)
        wb = w_hwio.astype(jnp.bfloat16).astype(jnp.float32)
        if upsample:
            xb = jnp.repeat(jnp.repeat(xb, 2, axis=1), 2, axis=2)
        y = lax.conv_general_dilated(xb, wb, (stride, stride), ((1, 1), (1, 1)),
                                     dimension_numbers=('NHWC', 'HWIO', 'NHWC'))
        return y + br

    xt = jax.random.normal(kc(), (2, 8, 8, 32), jnp.float32)
    wt = _init_w(kc, (3, 3, 32, 64))
    bt = _init_w(kc, (64,), 0.01)
    wt2 = wt.reshape(9 * 32, 64).astype(jnp.bfloat16)
    y0 = conv3x3_fused(xt, wt2, bt)
    assert bool(jnp.allclose(y0, conv_ref(xt, wt, bt), atol=3e-2, rtol=3e-2))
    y1 = conv3x3_fused(xt, wt2, bt, stride=2)
    assert bool(jnp.allclose(y1, conv_ref(xt, wt, bt, stride=2),
                             atol=3e-2, rtol=3e-2))
    y2 = upsample_conv(xt, upsample_phase_weights(wt), bt)
    assert bool(jnp.allclose(y2, conv_ref(xt, wt, bt, upsample=True),
                             atol=3e-2, rtol=3e-2))

    def attn_ref(qkv_in, nh):
        Bq, T, C3 = qkv_in.shape
        C = C3 // 3
        dh = C // nh
        r = qkv_in.reshape(Bq, T, nh, 3, dh).astype(jnp.bfloat16).astype(jnp.float32)
        q, k, v = r[:, :, :, 0], r[:, :, :, 1], r[:, :, :, 2]
        s = jnp.einsum('bqhd,bkhd->bhqk', q, k)
        p = jax.nn.softmax(s, axis=-1)
        o = jnp.einsum('bhqk,bkhd->bqhd',
                       p.astype(jnp.bfloat16).astype(jnp.float32), v)
        return o.reshape(Bq, T, C)

    qkv_t = jax.random.normal(kc(), (2, 64, 192), jnp.float32) * 0.3
    at = flash_attention(qkv_t, 4)
    assert bool(jnp.allclose(at, attn_ref(qkv_t, 4), atol=3e-2, rtol=3e-2))

    # --- full forward ---
    outs, h_final = controlnet_reference_only_forward(
        params, x, hint, timesteps, context,
        attention_bank=None, attention_mode=None, uc=False)

    jax.block_until_ready(h_final)
    assert outs == []                                   # PyTorch forward returns []
    assert h_final.shape == (B, model_channels, HW, HW)
    assert bool(jnp.isfinite(h_final).all())
    print("KERNEL_OK")
</pallas_src>

<mosaic_0001>
module attributes {stable_mosaic.version = 11 : i64} {
  func.func @_gn_conv_kernel(%arg0: i32, %arg1: memref<1x8x8x32xf32, #tpu.memory_space<vmem>>, %arg2: memref<288x64xbf16, #tpu.memory_space<vmem>>, %arg3: memref<1x64xf32, #tpu.memory_space<vmem>>, %arg4: memref<1x8x8x64xf32, #tpu.memory_space<vmem>>) attributes {dimension_semantics = [#tpu.dimension_semantics<parallel>], iteration_bounds = array<i64: 2>, scalar_prefetch = 0 : i64, scratch_operands = 0 : i64, tpu.core_type = #tpu.core_type<tc>, window_params = [{transform_indices = @transform_0, window_bounds = array<i64: 1, 8, 8, 32>}, {pipeline_mode = #tpu.pipeline_mode<synchronous>, transform_indices = @transform_1, window_bounds = array<i64: 288, 64>}, {pipeline_mode = #tpu.pipeline_mode<synchronous>, transform_indices = @transform_2, window_bounds = array<i64: 1, 64>}, {transform_indices = @transform_3, window_bounds = array<i64: 1, 8, 8, 64>}]} {
    %c0 = arith.constant 0 : index
    %c0_0 = arith.constant 0 : index
    %c0_1 = arith.constant 0 : index
    %c0_2 = arith.constant 0 : index
    %0 = vector.load %arg1[%c0, %c0_0, %c0_1, %c0_2] : memref<1x8x8x32xf32, #tpu.memory_space<vmem>>, vector<1x8x8x32xf32>
    %1 = arith.truncf %0 : vector<1x8x8x32xf32> to vector<1x8x8x32xbf16>
    %cst = arith.constant 0.000000e+00 : bf16
    %2 = vector.broadcast %cst : bf16 to vector<1x1x8x32xbf16>
    %3 = tpu.concatenate %2, %1, %2 in 1 : vector<1x1x8x32xbf16>, vector<1x8x8x32xbf16>, vector<1x1x8x32xbf16> -> vector<1x10x8x32xbf16>
    %cst_3 = arith.constant 0.000000e+00 : bf16
    %4 = vector.broadcast %cst_3 : bf16 to vector<1x10x1x32xbf16>
    %5 = tpu.concatenate %4, %3, %4 in 2 : vector<1x10x1x32xbf16>, vector<1x10x8x32xbf16>, vector<1x10x1x32xbf16> -> vector<1x10x10x32xbf16>
    %cst_4 = arith.constant 0.000000e+00 : f32
    %6 = vector.broadcast %cst_4 : f32 to vector<64x64xf32>
    %7 = vector.extract_strided_slice %5 {offsets = [0, 0, 0, 0], sizes = [1, 8, 8, 32], strides = [1, 1, 1, 1]} : vector<1x10x10x32xbf16> to vector<1x8x8x32xbf16>
    %8 = vector.shape_cast %7 : vector<1x8x8x32xbf16> to vector<64x32xbf16>
    %c0_5 = arith.constant 0 : index
    %c0_6 = arith.constant 0 : index
    %9 = vector.load %arg2[%c0_5, %c0_6] : memref<288x64xbf16, #tpu.memory_space<vmem>>, vector<32x64xbf16>
    %cst_7 = arith.constant dense<0.000000e+00> : vector<64x64xf32>
    %10 = tpu.matmul %8, %9, %cst_7 {dimension_numbers = #tpu.dot_dimension_numbers<[1], [0], [0], [1], [0, 0, 1, 1], [], []>} : vector<64x32xbf16>, vector<32x64xbf16>, vector<64x64xf32> -> vector<64x64xf32>
    %11 = arith.addf %6, %10 : vector<64x64xf32>
    %12 = vector.extract_strided_slice %5 {offsets = [0, 0, 1, 0], sizes = [1, 8, 8, 32], strides = [1, 1, 1, 1]} : vector<1x10x10x32xbf16> to vector<1x8x8x32xbf16>
    %13 = vector.shape_cast %12 : vector<1x8x8x32xbf16> to vector<64x32xbf16>
    %c32 = arith.constant 32 : index
    %c0_8 = arith.constant 0 : index
    %14 = vector.load %arg2[%c32, %c0_8] : memref<288x64xbf16, #tpu.memory_space<vmem>>, vector<32x64xbf16>
    %cst_9 = arith.constant dense<0.000000e+00> : vector<64x64xf32>
    %15 = tpu.matmul %13, %14, %cst_9 {dimension_numbers = #tpu.dot_dimension_numbers<[1], [0], [0], [1], [0, 0, 1, 1], [], []>} : vector<64x32xbf16>, vector<32x64xbf16>, vector<64x64xf32> -> vector<64x64xf32>
    %16 = arith.addf %11, %15 : vector<64x64xf32>
    %17 = vector.extract_strided_slice %5 {offsets = [0, 0, 2, 0], sizes = [1, 8, 8, 32], strides = [1, 1, 1, 1]} : vector<1x10x10x32xbf16> to vector<1x8x8x32xbf16>
    %18 = vector.shape_cast %17 : vector<1x8x8x32xbf16> to vector<64x32xbf16>
    %c64 = arith.constant 64 : index
    %c0_10 = arith.constant 0 : index
    %19 = vector.load %arg2[%c64, %c0_10] : memref<288x64xbf16, #tpu.memory_space<vmem>>, vector<32x64xbf16>
    %cst_11 = arith.constant dense<0.000000e+00> : vector<64x64xf32>
    %20 = tpu.matmul %18, %19, %cst_11 {dimension_numbers = #tpu.dot_dimension_numbers<[1], [0], [0], [1], [0, 0, 1, 1], [], []>} : vector<64x32xbf16>, vector<32x64xbf16>, vector<64x64xf32> -> vector<64x64xf32>
    %21 = arith.addf %16, %20 : vector<64x64xf32>
    %22 = vector.extract_strided_slice %5 {offsets = [0, 1, 0, 0], sizes = [1, 8, 8, 32], strides = [1, 1, 1, 1]} : vector<1x10x10x32xbf16> to vector<1x8x8x32xbf16>
    %23 = vector.shape_cast %22 : vector<1x8x8x32xbf16> to vector<64x32xbf16>
    %c96 = arith.constant 96 : index
    %c0_12 = arith.constant 0 : index
    %24 = vector.load %arg2[%c96, %c0_12] : memref<288x64xbf16, #tpu.memory_space<vmem>>, vector<32x64xbf16>
    %cst_13 = arith.constant dense<0.000000e+00> : vector<64x64xf32>
    %25 = tpu.matmul %23, %24, %cst_13 {dimension_numbers = #tpu.dot_dimension_numbers<[1], [0], [0], [1], [0, 0, 1, 1], [], []>} : vector<64x32xbf16>, vector<32x64xbf16>, vector<64x64xf32> -> vector<64x64xf32>
    %26 = arith.addf %21, %25 : vector<64x64xf32>
    %27 = vector.extract_strided_slice %5 {offsets = [0, 1, 1, 0], sizes = [1, 8, 8, 32], strides = [1, 1, 1, 1]} : vector<1x10x10x32xbf16> to vector<1x8x8x32xbf16>
    %28 = vector.shape_cast %27 : vector<1x8x8x32xbf16> to vector<64x32xbf16>
    %c128 = arith.constant 128 : index
    %c0_14 = arith.constant 0 : index
    %29 = vector.load %arg2[%c128, %c0_14] : memref<288x64xbf16, #tpu.memory_space<vmem>>, vector<32x64xbf16>
    %cst_15 = arith.constant dense<0.000000e+00> : vector<64x64xf32>
    %30 = tpu.matmul %28, %29, %cst_15 {dimension_numbers = #tpu.dot_dimension_numbers<[1], [0], [0], [1], [0, 0, 1, 1], [], []>} : vector<64x32xbf16>, vector<32x64xbf16>, vector<64x64xf32> -> vector<64x64xf32>
    %31 = arith.addf %26, %30 : vector<64x64xf32>
    %32 = vector.extract_strided_slice %5 {offsets = [0, 1, 2, 0], sizes = [1, 8, 8, 32], strides = [1, 1, 1, 1]} : vector<1x10x10x32xbf16> to vector<1x8x8x32xbf16>
    %33 = vector.shape_cast %32 : vector<1x8x8x32xbf16> to vector<64x32xbf16>
    %c160 = arith.constant 160 : index
    %c0_16 = arith.constant 0 : index
    %34 = vector.load %arg2[%c160, %c0_16] : memref<288x64xbf16, #tpu.memory_space<vmem>>, vector<32x64xbf16>
    %cst_17 = arith.constant dense<0.000000e+00> : vector<64x64xf32>
    %35 = tpu.matmul %33, %34, %cst_17 {dimension_numbers = #tpu.dot_dimension_numbers<[1], [0], [0], [1], [0, 0, 1, 1], [], []>} : vector<64x32xbf16>, vector<32x64xbf16>, vector<64x64xf32> -> vector<64x64xf32>
    %36 = arith.addf %31, %35 : vector<64x64xf32>
    %37 = vector.extract_strided_slice %5 {offsets = [0, 2, 0, 0], sizes = [1, 8, 8, 32], strides = [1, 1, 1, 1]} : vector<1x10x10x32xbf16> to vector<1x8x8x32xbf16>
    %38 = vector.shape_cast %37 : vector<1x8x8x32xbf16> to vector<64x32xbf16>
    %c192 = arith.constant 192 : index
    %c0_18 = arith.constant 0 : index
    %39 = vector.load %arg2[%c192, %c0_18] : memref<288x64xbf16, #tpu.memory_space<vmem>>, vector<32x64xbf16>
    %cst_19 = arith.constant dense<0.000000e+00> : vector<64x64xf32>
    %40 = tpu.matmul %38, %39, %cst_19 {dimension_numbers = #tpu.dot_dimension_numbers<[1], [0], [0], [1], [0, 0, 1, 1], [], []>} : vector<64x32xbf16>, vector<32x64xbf16>, vector<64x64xf32> -> vector<64x64xf32>
    %41 = arith.addf %36, %40 : vector<64x64xf32>
    %42 = vector.extract_strided_slice %5 {offsets = [0, 2, 1, 0], sizes = [1, 8, 8, 32], strides = [1, 1, 1, 1]} : vector<1x10x10x32xbf16> to vector<1x8x8x32xbf16>
    %43 = vector.shape_cast %42 : vector<1x8x8x32xbf16> to vector<64x32xbf16>
    %c224 = arith.constant 224 : index
    %c0_20 = arith.constant 0 : index
    %44 = vector.load %arg2[%c224, %c0_20] : memref<288x64xbf16, #tpu.memory_space<vmem>>, vector<32x64xbf16>
    %cst_21 = arith.constant dense<0.000000e+00> : vector<64x64xf32>
    %45 = tpu.matmul %43, %44, %cst_21 {dimension_numbers = #tpu.dot_dimension_numbers<[1], [0], [0], [1], [0, 0, 1, 1], [], []>} : vector<64x32xbf16>, vector<32x64xbf16>, vector<64x64xf32> -> vector<64x64xf32>
    %46 = arith.addf %41, %45 : vector<64x64xf32>
    %47 = vector.extract_strided_slice %5 {offsets = [0, 2, 2, 0], sizes = [1, 8, 8, 32], strides = [1, 1, 1, 1]} : vector<1x10x10x32xbf16> to vector<1x8x8x32xbf16>
    %48 = vector.shape_cast %47 : vector<1x8x8x32xbf16> to vector<64x32xbf16>
    %c256 = arith.constant 256 : index
    %c0_22 = arith.constant 0 : index
    %49 = vector.load %arg2[%c256, %c0_22] : memref<288x64xbf16, #tpu.memory_space<vmem>>, vector<32x64xbf16>
    %cst_23 = arith.constant dense<0.000000e+00> : vector<64x64xf32>
    %50 = tpu.matmul %48, %49, %cst_23 {dimension_numbers = #tpu.dot_dimension_numbers<[1], [0], [0], [1], [0, 0, 1, 1], [], []>} : vector<64x32xbf16>, vector<32x64xbf16>, vector<64x64xf32> -> vector<64x64xf32>
    %51 = arith.addf %46, %50 : vector<64x64xf32>
    %c0_24 = arith.constant 0 : index
    %c0_25 = arith.constant 0 : index
    %52 = vector.load %arg3[%c0_24, %c0_25] : memref<1x64xf32, #tpu.memory_space<vmem>>, vector<1x64xf32>
    %53 = vector.broadcast %52 : vector<1x64xf32> to vector<64x64xf32>
    %54 = arith.addf %51, %53 : vector<64x64xf32>
    %55 = vector.shape_cast %54 : vector<64x64xf32> to vector<1x8x8x64xf32>
    %c0_26 = arith.constant 0 : index
    %c0_27 = arith.constant 0 : index
    %c0_28 = arith.constant 0 : index
    %c0_29 = arith.constant 0 : index
    %56 = vector.load %arg4[%c0_26, %c0_27, %c0_28, %c0_29] : memref<1x8x8x64xf32, #tpu.memory_space<vmem>>, vector<1x8x8x64xf32>
    tpu.vector_store %arg4[%c0_26, %c0_27, %c0_28, %c0_29], %55 {strides = array<i32>} : memref<1x8x8x64xf32, #tpu.memory_space<vmem>>, vector<1x8x8x64xf32>,
    return
  }
  func.func @transform_0(%arg0: i32) -> (i32, i32, i32, i32) {
    %c0_i32 = arith.constant 0 : i32
    %c0_i32_0 = arith.constant 0 : i32
    %c0_i32_1 = arith.constant 0 : i32
    %c0_i32_2 = arith.constant 0 : i32
    return %arg0, %c0_i32, %c0_i32_0, %c0_i32_1 : i32, i32, i32, i32
  }
  func.func @transform_1(%arg0: i32) -> (i32, i32) {
    %c0_i32 = arith.constant 0 : i32
    %c0_i32_0 = arith.constant 0 : i32
    %c0_i32_1 = arith.constant 0 : i32
    return %c0_i32, %c0_i32_0 : i32, i32
  }
  func.func @transform_2(%arg0: i32) -> (i32, i32) {
    %c0_i32 = arith.constant 0 : i32
    %c0_i32_0 = arith.constant 0 : i32
    %c0_i32_1 = arith.constant 0 : i32
    return %c0_i32, %c0_i32_0 : i32, i32
  }
  func.func @transform_3(%arg0: i32) -> (i32, i32, i32, i32) {
    %c0_i32 = arith.constant 0 : i32
    %c0_i32_0 = arith.constant 0 : i32
    %c0_i32_1 = arith.constant 0 : i32
    %c0_i32_2 = arith.constant 0 : i32
    return %arg0, %c0_i32, %c0_i32_0, %c0_i32_1 : i32, i32, i32, i32
  }
}

</mosaic_0001>

<llo_original>
// kernel: tpu_custom_call.1
$region0: #{tpu_custom_call.1}
  #allocation0 [shape = 'u32[]', space=smem, size = 0x4, offset = 0x4, fixed_abs, tag = 'smem constant byte address 0x4 - core index']
  #allocation1 [shape = 'u32[144,128]{1,0:T(1,128)}', space=vmem, size = 0x12000, scoped, tag = 'internal scratch']
  %s0 = inlined_call_operand.vmem [shape: f32[2,8,8,32], index: 0, kind: input, shape index: {}]
  %s1 = inlined_call_operand.vmem [shape: bf16[288,64], index: 1, kind: input, shape index: {}]
  %s2 = inlined_call_operand.vmem [shape: f32[1,64], index: 2, kind: input, shape index: {}]
  %s3 = inlined_call_operand.hbm [shape: f32[2,8,8,64], index: 3, kind: output, shape index: {}]
  %s4 = sld [smem:[#allocation0]]
  $region45: #{tpu_custom_call.1} parent=0
    _
  %s6 = ssub.s32 1, %s4
  %s7 = scalar_select 0, %s6, %s4
  $region1: #{tpu_custom_call.1} parent=0
    #allocation2 [shape = 'u8[65536]{0}', space=vmem, size = 0x10000, scoped, tag = 'output window, operand 0']
    #allocation3 [shape = 's32[2]{0}', space=sflag, size = 0x8, scoped, tag = 'scoped memory for tpu_custom_call.1']
    %8 = vsyncpa [#allocation3], 0
    %s9 = scalar_lea.sflag [#allocation3], 1
    %10 = vsyncpa %s9, 0
    loop: start=0, step=1, limit=4
    $region2: #{tpu_custom_call.1} parent=1 // loop_pre_header
      _
    $region3: #{tpu_custom_call.1} parent=1 // loop_header
      %s12 = sphi 0, %s16
      %p13 = scmp.ge.s32.totalorder %s12, 4
      %s22 = sphi 0, %s24
      %s25 = sphi 0, %s22
      %s26 = sphi 0, %s25
      %s42 = sphi 0, %s26
      %s46 = sphi 0, %s46
      %s48 = sphi 0, %s46
      %s49 = sphi 0, %s48
      %s63 = sphi 0, %s49
      %s67 = sphi 0, %s67
      %s69 = sphi 0, %s67
      %s70 = sphi 0, %s69
      %s84 = sphi 0, %s70
      %s90 = sphi 0, %s92
      %s93 = sphi 0, %s90
      %s94 = sphi 0, %s93
      %s110 = sphi 0, %s94
    $region4: #{tpu_custom_call.1} parent=1 // loop_header_branch
      %15 = sbr.rel (%p13) target = $region8
    $region5: #{tpu_custom_call.1} parent=1 // loop_body
      %s17 = ssub.s32 %s12, 1
      %s18 = ssub.s32 %s12, 2
      %s19 = sadd.s32 %s12, 1
      %s20 = ssub.s32 %s12, %s19
      %p21 = scmp.eq.s32.totalorder %s20, 0
      %s23 = sadd.s32 %s22, 1
      %s24 = scalar_select %p21, %s22, %s23
      %p27 = pneg %p21
      %p28 = scmp.eq.s32.totalorder %s12, 1
      %p29 = por %p27, %p28
      %p30 = scmp.ne.s32.totalorder %s22, %s25
      %p31 = scmp.eq.s32.totalorder %s12, 0
      %p32 = por %p30, %p31
      %p33 = scmp.ne.s32.totalorder %s22, %s25
      %p34 = scmp.eq.s32.totalorder %s17, 1
      %p35 = por %p33, %p34
      %p36 = scmp.ne.s32.totalorder %s25, %s26
      %p37 = scmp.eq.s32.totalorder %s17, 0
      %p38 = por %p36, %p37
      %p39 = scmp.ne.s32.totalorder %s25, %s26
      %p40 = scmp.eq.s32.totalorder %s18, 1
      %p41 = por %p39, %p40
      %p43 = scmp.ne.s32.totalorder %s26, %s42
      %p44 = scmp.eq.s32.totalorder %s18, 0
      %p45 = por %p43, %p44
      %s47 = sadd.s32 %s46, 1
      %p50 = scmp.eq.s32.totalorder %s12, 1
      %p51 = scmp.ne.s32.totalorder %s46, %s48
      %p52 = scmp.eq.s32.totalorder %s12, 0
      %p53 = por %p51, %p52
      %p54 = scmp.ne.s32.totalorder %s46, %s48
      %p55 = scmp.eq.s32.totalorder %s17, 1
      %p56 = por %p54, %p55
      %p57 = scmp.ne.s32.totalorder %s48, %s49
      %p58 = scmp.eq.s32.totalorder %s17, 0
      %p59 = por %p57, %p58
      %p60 = scmp.ne.s32.totalorder %s48, %s49
      %p61 = scmp.eq.s32.totalorder %s18, 1
      %p62 = por %p60, %p61
      %p64 = scmp.ne.s32.totalorder %s49, %s63
      %p65 = scmp.eq.s32.totalorder %s18, 0
      %p66 = por %p64, %p65
      %s68 = sadd.s32 %s67, 1
      %p71 = scmp.eq.s32.totalorder %s12, 1
      %p72 = scmp.ne.s32.totalorder %s67, %s69
      %p73 = scmp.eq.s32.totalorder %s12, 0
      %p74 = por %p72, %p73
      %p75 = scmp.ne.s32.totalorder %s67, %s69
      %p76 = scmp.eq.s32.totalorder %s17, 1
      %p77 = por %p75, %p76
      %p78 = scmp.ne.s32.totalorder %s69, %s70
      %p79 = scmp.eq.s32.totalorder %s17, 0
      %p80 = por %p78, %p79
      %p81 = scmp.ne.s32.totalorder %s69, %s70
      %p82 = scmp.eq.s32.totalorder %s18, 1
      %p83 = por %p81, %p82
      %p85 = scmp.ne.s32.totalorder %s70, %s84
      %p86 = scmp.eq.s32.totalorder %s18, 0
      %p87 = por %p85, %p86
      %s88 = ssub.s32 %s12, %s19
      %p89 = scmp.eq.s32.totalorder %s88, 0
      %s91 = sadd.s32 %s90, 1
      %s92 = scalar_select %p89, %s90, %s91
      %p95 = pneg %p89
      %p96 = scmp.eq.s32.totalorder %s12, 1
      %p97 = por %p95, %p96
      %p98 = scmp.ne.s32.totalorder %s90, %s93
      %p99 = scmp.eq.s32.totalorder %s12, 0
      %p100 = por %p98, %p99
      %p101 = scmp.ne.s32.totalorder %s90, %s93
      %p102 = scmp.eq.s32.totalorder %s17, 1
      %p103 = por %p101, %p102
      %p104 = scmp.ne.s32.totalorder %s93, %s94
      %p105 = scmp.eq.s32.totalorder %s17, 0
      %p106 = por %p104, %p105
      %p107 = scmp.ne.s32.totalorder %s93, %s94
      %p108 = scmp.eq.s32.totalorder %s18, 1
      %p109 = por %p107, %p108
      %p111 = scmp.ne.s32.totalorder %s94, %s110
      %p112 = scmp.eq.s32.totalorder %s18, 0
      %p113 = por %p111, %p112
      %p114 = scmp.le.s32.totalorder 1, %s12
      %p115 = scmp.lt.s32.totalorder %s12, 3
      %p116 = pnand %p114, %p115
      %p117 = pneg %p116
      // Predicated region
      $region9: #{tpu_custom_call.1} parent=5 // pred_check
        _
      $region10: #{tpu_custom_call.1} parent=5 // pred_check_branch
        %119 = sbr.rel (%p116) target = $region12
      $region11: #{tpu_custom_call.1} parent=5 // pred_region
        %s120 = ssub.s32 %s12, 1
        // Predicated region
        $region13: #{tpu_custom_call.1} parent=11 // pred_check
          %p121 = pneg %p59
        $region14: #{tpu_custom_call.1} parent=11 // pred_check_branch
          %123 = sbr.rel (%p121) target = $region16
        $region15: #{tpu_custom_call.1} parent=11 // pred_region
          _
        $region16: #{tpu_custom_call.1} parent=11 // pred_fallthru
          _
        // Predicated region
        $region17: #{tpu_custom_call.1} parent=11 // pred_check
          %p124 = pneg %p80
        $region18: #{tpu_custom_call.1} parent=11 // pred_check_branch
          %126 = sbr.rel (%p124) target = $region20
        $region19: #{tpu_custom_call.1} parent=11 // pred_region
          _
        $region20: #{tpu_custom_call.1} parent=11 // pred_fallthru
          _
      $region12: #{tpu_custom_call.1} parent=5 // pred_fallthru
        _
      %p127 = scmp.lt.s32.totalorder %s12, 2
      // Predicated region
      $region21: #{tpu_custom_call.1} parent=5 // pred_check
        %p128 = pneg %p127
      $region22: #{tpu_custom_call.1} parent=5 // pred_check_branch
        %130 = sbr.rel (%p128) target = $region24
      $region23: #{tpu_custom_call.1} parent=5 // pred_region
        // Predicated region
        $region25: #{tpu_custom_call.1} parent=23 // pred_check
          %p131 = pneg %p32
        $region26: #{tpu_custom_call.1} parent=23 // pred_check_branch
          %133 = sbr.rel (%p131) target = $region28
        $region27: #{tpu_custom_call.1} parent=23 // pred_region
          %p134 = scmp.lt.s32.totalorder %s12, 1
          %s135 = scalar_select %p134, %s12, 1
          %s136 = smul.addr %s135, 8
          %s137 = smul.addr %s136, 8
          %s138 = scalar_lea.vmem %s0, %s137
        $region28: #{tpu_custom_call.1} parent=23 // pred_fallthru
          _
      $region24: #{tpu_custom_call.1} parent=5 // pred_fallthru
        _
      %p139 = scmp.le.s32.totalorder 1, %s12
      %p140 = scmp.lt.s32.totalorder %s12, 3
      %p141 = pnand %p139, %p140
      %p142 = pneg %p141
      // Predicated region
      $region29: #{tpu_custom_call.1} parent=5 // pred_check
        _
      $region30: #{tpu_custom_call.1} parent=5 // pred_check_branch
        %144 = sbr.rel (%p141) target = $region32
      $region31: #{tpu_custom_call.1} parent=5 // pred_region
        %s145 = ssub.s32 %s12, 1
        %p146 = scmp.lt.s32.totalorder %s17, 1
        %s147 = scalar_select %p146, %s17, 1
        %s148 = smul.addr %s147, 8
        %s149 = smul.addr %s148, 8
        %s150 = scalar_lea.vmem %s0, %s149
        %p151 = pneg %p38
        %p152 = pneg %p35
        %p153 = pneg %p59
        %p154 = pneg %p56
        %p155 = pneg %p80
        %p156 = pneg %p77
        %p157 = pneg %p106
        %p158 = pneg %p103
        %s159 = sand.u32 %s93, 1
        %s160 = scalar_lea.sflag [#allocation3], %s159
        %s161 = sand.u32 %s93, 1
        %s162 = smul.addr %s161, 64
        %s163 = scalar_lea.vmem [#allocation2], %s162
        %p164 = scmp.lt.s32.totalorder %s17, 1
        %s165 = scalar_select %p164, %s17, 1
        %s166 = smul.addr %s165, 8
        %s167 = smul.addr %s166, 8
        %s168 = scalar_lea.vmem %s0, %s167
        %v170 = vld [vmem:[%s168] sm:$0xff]
        %v171 = vld [vmem:[%s168 + $0x8] sm:$0xff]
        %v172 = vld [vmem:[%s168 + $0x10] sm:$0xff]
        %v173 = vld [vmem:[%s168 + $0x18] sm:$0xff]
        %v174 = vld [vmem:[%s168 + $0x20] sm:$0xff]
        %v175 = vld [vmem:[%s168 + $0x28] sm:$0xff]
        %v176 = vld [vmem:[%s168 + $0x30] sm:$0xff]
        %v177 = vld [vmem:[%s168 + $0x38] sm:$0xff]
        %v178 = vpack.c.bf16 %v170, %v170
        %v179 = vpack.c.bf16 %v171, %v171
        %v180 = vpack.c.bf16 %v172, %v172
        %v181 = vpack.c.bf16 %v173, %v173
        %v182 = vpack.c.bf16 %v174, %v174
        %v183 = vpack.c.bf16 %v175, %v175
        %v184 = vpack.c.bf16 %v176, %v176
        %v185 = vpack.c.bf16 %v177, %v177
        %v187 = vshrl.u32 0, 16
        %v189 = vrot.slane %v187, 7
        %v190 = vshll.u32 0, 16
        %v192 = vor.u32 %v189, %v190
        %v194 = vshrl.u32 %v178, 16
        %v196 = vrot.slane %v194, 7
        %v197 = vshll.u32 %v178, 16
        %v199 = vor.u32 %v196, %v197
        %v201 = vshrl.u32 %v179, 16
        %v203 = vrot.slane %v201, 7
        %v204 = vshll.u32 %v179, 16
        %v206 = vor.u32 %v203, %v204
        %v208 = vshrl.u32 %v180, 16
        %v210 = vrot.slane %v208, 7
        %v211 = vshll.u32 %v180, 16
        %v213 = vor.u32 %v210, %v211
        %v215 = vshrl.u32 %v181, 16
        %v217 = vrot.slane %v215, 7
        %v218 = vshll.u32 %v181, 16
        %v220 = vor.u32 %v217, %v218
        %v222 = vshrl.u32 %v182, 16
        %v224 = vrot.slane %v222, 7
        %v225 = vshll.u32 %v182, 16
        %v227 = vor.u32 %v224, %v225
        %v229 = vshrl.u32 %v183, 16
        %v231 = vrot.slane %v229, 7
        %v232 = vshll.u32 %v183, 16
        %v234 = vor.u32 %v231, %v232
        %v236 = vshrl.u32 %v184, 16
        %v238 = vrot.slane %v236, 7
        %v239 = vshll.u32 %v184, 16
        %v241 = vor.u32 %v238, %v239
        %v243 = vshrl.u32 %v185, 16
        %v245 = vrot.slane %v243, 7
        %v246 = vshll.u32 %v185, 16
        %v248 = vor.u32 %v245, %v246
        %vm258 = vcmask 1040384
        %vm259 = vsmask.f32 256
        %vm260 = vmand %vm258, %vm259
        %v261 = vsel %vm260, 0, %v192
        %v262 = vsel %vm260, 0, %v199
        %v263 = vsel %vm260, 0, %v206
        %v264 = vsel %vm260, 0, %v213
        %v265 = vsel %vm260, 0, %v220
        %v266 = vsel %vm260, 0, %v227
        %v267 = vsel %vm260, 0, %v234
        %v268 = vsel %vm260, 0, %v241
        %v269 = vsel %vm260, 0, %v248
        %vm270 = vcmask 1044480
        %vm271 = vsmask.f32 4352
        %vm272 = vmand %vm270, %vm271
        %v273 = vsel %vm272, %v261, 0
        %v274 = vsel %vm272, %v262, 0
        %v275 = vsel %vm272, %v263, 0
        %v276 = vsel %vm272, %v264, 0
        %v277 = vsel %vm272, %v265, 0
        %v278 = vsel %vm272, %v266, 0
        %v279 = vsel %vm272, %v267, 0
        %v280 = vsel %vm272, %v268, 0
        %v281 = vsel %vm272, %v269, 0
        %v282 = vld [vmem:[%s1] sm:$0xf]
        %v283 = vld [vmem:[%s1 + $0x4] sm:$0xf]
        %v284 = vld [vmem:[%s1 + $0x8] sm:$0xf]
        %v285 = vld [vmem:[%s1 + $0xc] sm:$0xf]
        %v294 = vunpack.c.l.b16 %v273
        %v295 = vunpack.c.h.b16 %v273
        %v296 = vunpack.c.l.b16 %v274
        %v297 = vunpack.c.h.b16 %v274
        %v298 = vunpack.c.l.b16 %v275
        %v299 = vunpack.c.h.b16 %v275
        %v300 = vunpack.c.l.b16 %v276
        %v301 = vunpack.c.h.b16 %v276
        %v302 = vunpack.c.l.b16 %v277
        %v303 = vunpack.c.h.b16 %v277
        %v304 = vunpack.c.l.b16 %v278
        %v305 = vunpack.c.h.b16 %v278
        %v306 = vunpack.c.l.b16 %v279
        %v307 = vunpack.c.h.b16 %v279
        %v308 = vunpack.c.l.b16 %v280
        %v309 = vunpack.c.h.b16 %v280
        %v310 = vpack.c.b16 %v294, %v294
        %v311 = vpack.c.b16 %v295, %v295
        %v312 = vpack.c.b16 %v296, %v296
        %v313 = vpack.c.b16 %v297, %v297
        %v314 = vpack.c.b16 %v298, %v298
        %v315 = vpack.c.b16 %v299, %v299
        %v316 = vpack.c.b16 %v300, %v300
        %v317 = vpack.c.b16 %v301, %v301
        %v318 = vpack.c.b16 %v302, %v302
        %v319 = vpack.c.b16 %v303, %v303
        %v320 = vpack.c.b16 %v304, %v304
        %v321 = vpack.c.b16 %v305, %v305
        %v322 = vpack.c.b16 %v306, %v306
        %v323 = vpack.c.b16 %v307, %v307
        %v324 = vpack.c.b16 %v308, %v308
        %v325 = vpack.c.b16 %v309, %v309
        %vm326 = vsmask.f32 3328
        %vm327 = vsmask.f32 7440
        %vm328 = vmor %vm326, %vm327
        %v330 = vshrl.u32 %v310, 16
        %v332 = vrot.slane %v330, 4
        %v333 = vshll.u32 %v310, 16
        %v335 = vrot.slane %v333, 5
        %v336 = vor.u32 %v332, %v335
        %v337 = vrot.slane %v336, 4
        %v339 = vshll.u32 %v311, 16
        %v341 = vrot.slane %v339, 5
        %v342 = vsel %vm328, %v337, %v341
        %v344 = vshrl.u32 %v312, 16
        %v346 = vrot.slane %v344, 4
        %v347 = vshll.u32 %v312, 16
        %v349 = vrot.slane %v347, 5
        %v350 = vor.u32 %v346, %v349
        %v351 = vrot.slane %v350, 4
        %v353 = vshll.u32 %v313, 16
        %v355 = vrot.slane %v353, 5
        %v356 = vsel %vm328, %v351, %v355
        %v358 = vshrl.u32 %v314, 16
        %v360 = vrot.slane %v358, 4
        %v361 = vshll.u32 %v314, 16
        %v363 = vrot.slane %v361, 5
        %v364 = vor.u32 %v360, %v363
        %v365 = vrot.slane %v364, 4
        %v367 = vshll.u32 %v315, 16
        %v369 = vrot.slane %v367, 5
        %v370 = vsel %vm328, %v365, %v369
        %v372 = vshrl.u32 %v316, 16
        %v374 = vrot.slane %v372, 4
        %v375 = vshll.u32 %v316, 16
        %v377 = vrot.slane %v375, 5
        %v378 = vor.u32 %v374, %v377
        %v379 = vrot.slane %v378, 4
        %v381 = vshll.u32 %v317, 16
        %v383 = vrot.slane %v381, 5
        %v384 = vsel %vm328, %v379, %v383
        %v386 = vshrl.u32 %v318, 16
        %v388 = vrot.slane %v386, 4
        %v389 = vshll.u32 %v318, 16
        %v391 = vrot.slane %v389, 5
        %v392 = vor.u32 %v388, %v391
        %v393 = vrot.slane %v392, 4
        %v395 = vshll.u32 %v319, 16
        %v397 = vrot.slane %v395, 5
        %v398 = vsel %vm328, %v393, %v397
        %v400 = vshrl.u32 %v320, 16
        %v402 = vrot.slane %v400, 4
        %v403 = vshll.u32 %v320, 16
        %v405 = vrot.slane %v403, 5
        %v406 = vor.u32 %v402, %v405
        %v407 = vrot.slane %v406, 4
        %v409 = vshll.u32 %v321, 16
        %v411 = vrot.slane %v409, 5
        %v412 = vsel %vm328, %v407, %v411
        %v414 = vshrl.u32 %v322, 16
        %v416 = vrot.slane %v414, 4
        %v417 = vshll.u32 %v322, 16
        %v419 = vrot.slane %v417, 5
        %v420 = vor.u32 %v416, %v419
        %v421 = vrot.slane %v420, 4
        %v423 = vshll.u32 %v323, 16
        %v425 = vrot.slane %v423, 5
        %v426 = vsel %vm328, %v421, %v425
        %v428 = vshrl.u32 %v324, 16
        %v430 = vrot.slane %v428, 4
        %v431 = vshll.u32 %v324, 16
        %v433 = vrot.slane %v431, 5
        %v434 = vor.u32 %v430, %v433
        %v435 = vrot.slane %v434, 4
        %v437 = vshll.u32 %v325, 16
        %v439 = vrot.slane %v437, 5
        %v440 = vsel %vm328, %v435, %v439
        %v441 = vld [vmem:[%s1 + $0x10] sm:$0xf]
        %v442 = vld [vmem:[%s1 + $0x14] sm:$0xf]
        %v443 = vld [vmem:[%s1 + $0x18] sm:$0xf]
        %v444 = vld [vmem:[%s1 + $0x1c] sm:$0xf]
        %v445 = vunpack.c.l.b16 %v342
        %v446 = vunpack.c.l.b16 %v356
        %v447 = vunpack.c.l.b16 %v370
        %v448 = vunpack.c.l.b16 %v384
        %v449 = vunpack.c.l.b16 %v398
        %v450 = vunpack.c.l.b16 %v412
        %v451 = vunpack.c.l.b16 %v426
        %v452 = vunpack.c.l.b16 %v440
        %v453 = vpack.c.b16 %v446, %v445
        %v454 = vpack.c.b16 %v448, %v447
        %v455 = vpack.c.b16 %v450, %v449
        %v456 = vpack.c.b16 %v452, %v451
        %v461 = vunpack.c.l.b16 %v441
        %v462 = vunpack.c.l.b16 %v442
        %v463 = vunpack.c.l.b16 %v443
        %v464 = vunpack.c.l.b16 %v444
        %v465 = vpack.c.b16 %v462, %v461
        %v466 = vpack.c.b16 %v464, %v463
        %vm469 = vcmask 261120
        %v471 = vsel %vm469, %v453, 0
        %v474 = vsel %vm469, %v454, 0
        %v477 = vsel %vm469, %v455, 0
        %v480 = vsel %vm469, %v456, 0
        %482 = vmatprep.subr.bf16.mxu0 0
        %483 = vmatpush1.bf16.msra.mxu0 %v465
        %484 = vmatprep.subr.bf16.mxu0 0
        %485 = vmatpush1.bf16.msra.mxu0 %v466
        %486 = vmatprep.subr.bf16.mxu0 0
        %487 = vmatpush1.bf16.msra.mxu0 0
        %488 = vmatprep.subr.bf16.mxu0 0
        %489 = vmatpush1.bf16.msra.mxu0 0
        %490 = vmatprep.subr.bf16.mxu0 0
        %491 = vmatpush1.bf16.msra.mxu0 0
        %492 = vmatprep.subr.bf16.mxu0 0
        %493 = vmatpush1.bf16.msra.mxu0 0
        %494 = vmatprep.subr.bf16.mxu0 0
        %495 = vmatpush1.bf16.msra.mxu0 0
        %496 = vmatprep.subr.bf16.mxu0 0
        %497 = vmatpush1.bf16.msra.mxu0 0
        %498 = vmatprep.subr.bf16.mxu0 0
        %499 = vmatpush1.bf16.msra.mxu0 0
        %500 = vmatprep.subr.bf16.mxu0 0
        %501 = vmatpush1.bf16.msra.mxu0 0
        %502 = vmatprep.subr.bf16.mxu0 0
        %503 = vmatpush1.bf16.msra.mxu0 0
        %504 = vmatprep.subr.bf16.mxu0 0
        %505 = vmatpush1.bf16.msra.mxu0 0
        %506 = vmatprep.subr.bf16.mxu0 0
        %507 = vmatpush1.bf16.msra.mxu0 0
        %508 = vmatprep.subr.bf16.mxu0 0
        %509 = vmatpush1.bf16.msra.mxu0 0
        %510 = vmatprep.subr.bf16.mxu0 0
        %511 = vmatpush1.bf16.msra.mxu0 0
        %512 = vmatprep.subr.bf16.mxu0 0
        %513 = vmatpush1.bf16.msra.mxu0 0
        %514 = vmatprep.mubr.bf16.mxu0 0
        %515 = vmatmul.mubr.bf16.gmra.mrb[0].mxu0 %v471
        %v516 = vpop.f32.mrb[0].mxu0
        %v517 = vadd.f32 0.0, %v516
        %v518 = vpop.f32.mrb[0].mxu0
        %v519 = vpop.f32.mrb[0].mxu0
        %v520 = vadd.f32 0.0, %v519
        %v521 = vpop.f32.mrb[0].mxu0
        %522 = vmatprep.mubr.bf16.mxu0 0
        %523 = vmatmul.mubr.bf16.gmra.mrb[0].mxu0 %v474
        %v524 = vpop.f32.mrb[0].mxu0
        %v525 = vadd.f32 0.0, %v524
        %v526 = vpop.f32.mrb[0].mxu0
        %v527 = vpop.f32.mrb[0].mxu0
        %v528 = vadd.f32 0.0, %v527
        %v529 = vpop.f32.mrb[0].mxu0
        %530 = vmatprep.mubr.bf16.mxu0 0
        %531 = vmatmul.mubr.bf16.gmra.mrb[0].mxu0 %v477
        %v532 = vpop.f32.mrb[0].mxu0
        %v533 = vadd.f32 0.0, %v532
        %v534 = vpop.f32.mrb[0].mxu0
        %v535 = vpop.f32.mrb[0].mxu0
        %v536 = vadd.f32 0.0, %v535
        %v537 = vpop.f32.mrb[0].mxu0
        %538 = vmatprep.mubr.bf16.mxu0 0
        %539 = vmatmul.mubr.bf16.gmra.mrb[0].mxu0 %v480
        %v540 = vpop.f32.mrb[0].mxu0
        %v541 = vadd.f32 0.0, %v540
        %v542 = vpop.f32.mrb[0].mxu0
        %v543 = vpop.f32.mrb[0].mxu0
        %v544 = vadd.f32 0.0, %v543
        %v545 = vpop.f32.mrb[0].mxu0
        %546 = vdwg.mxu0
        %v547 = vpack.c.b16 %v296, %v294
        %v548 = vpack.c.b16 %v300, %v298
        %v549 = vpack.c.b16 %v304, %v302
        %v550 = vpack.c.b16 %v308, %v306
        %v555 = vunpack.c.l.b16 %v282
        %v556 = vunpack.c.l.b16 %v283
        %v557 = vunpack.c.l.b16 %v284
        %v558 = vunpack.c.l.b16 %v285
        %v559 = vpack.c.b16 %v556, %v555
        %v560 = vpack.c.b16 %v558, %v557
        %v564 = vsel %vm469, %v547, 0
        %v567 = vsel %vm469, %v548, 0
        %v570 = vsel %vm469, %v549, 0
        %v573 = vsel %vm469, %v550, 0
        %575 = vmatprep.subr.bf16.mxu0 0
        %576 = vmatpush1.bf16.msra.mxu0 %v559
        %577 = vmatprep.subr.bf16.mxu0 0
        %578 = vmatpush1.bf16.msra.mxu0 %v560
        %579 = vmatprep.subr.bf16.mxu0 0
        %580 = vmatpush1.bf16.msra.mxu0 0
        %581 = vmatprep.subr.bf16.mxu0 0
        %582 = vmatpush1.bf16.msra.mxu0 0
        %583 = vmatprep.subr.bf16.mxu0 0
        %584 = vmatpush1.bf16.msra.mxu0 0
        %585 = vmatprep.subr.bf16.mxu0 0
        %586 = vmatpush1.bf16.msra.mxu0 0
        %587 = vmatprep.subr.bf16.mxu0 0
        %588 = vmatpush1.bf16.msra.mxu0 0
        %589 = vmatprep.subr.bf16.mxu0 0
        %590 = vmatpush1.bf16.msra.mxu0 0
        %591 = vmatprep.subr.bf16.mxu0 0
        %592 = vmatpush1.bf16.msra.mxu0 0
        %593 = vmatprep.subr.bf16.mxu0 0
        %594 = vmatpush1.bf16.msra.mxu0 0
        %595 = vmatprep.subr.bf16.mxu0 0
        %596 = vmatpush1.bf16.msra.mxu0 0
        %597 = vmatprep.subr.bf16.mxu0 0
        %598 = vmatpush1.bf16.msra.mxu0 0
        %599 = vmatprep.subr.bf16.mxu0 0
        %600 = vmatpush1.bf16.msra.mxu0 0
        %601 = vmatprep.subr.bf16.mxu0 0
        %602 = vmatpush1.bf16.msra.mxu0 0
        %603 = vmatprep.subr.bf16.mxu0 0
        %604 = vmatpush1.bf16.msra.mxu0 0
        %605 = vmatprep.subr.bf16.mxu0 0
        %606 = vmatpush1.bf16.msra.mxu0 0
        %607 = vmatprep.mubr.bf16.mxu0 0
        %608 = vmatmul.mubr.bf16.gmra.mrb[0].mxu0 %v564
        %v609 = vpop.f32.mrb[0].mxu0
        %v610 = vadd.f32 %v517, %v609
        %v611 = vpop.f32.mrb[0].mxu0
        %v612 = vpop.f32.mrb[0].mxu0
        %v613 = vadd.f32 %v520, %v612
        %v614 = vpop.f32.mrb[0].mxu0
        %615 = vmatprep.mubr.bf16.mxu0 0
        %616 = vmatmul.mubr.bf16.gmra.mrb[0].mxu0 %v567
        %v617 = vpop.f32.mrb[0].mxu0
        %v618 = vadd.f32 %v525, %v617
        %v619 = vpop.f32.mrb[0].mxu0
        %v620 = vpop.f32.mrb[0].mxu0
        %v621 = vadd.f32 %v528, %v620
        %v622 = vpop.f32.mrb[0].mxu0
        %623 = vmatprep.mubr.bf16.mxu0 0
        %624 = vmatmul.mubr.bf16.gmra.mrb[0].mxu0 %v570
        %v625 = vpop.f32.mrb[0].mxu0
        %v626 = vadd.f32 %v533, %v625
        %v627 = vpop.f32.mrb[0].mxu0
        %v628 = vpop.f32.mrb[0].mxu0
        %v629 = vadd.f32 %v536, %v628
        %v630 = vpop.f32.mrb[0].mxu0
        %631 = vmatprep.mubr.bf16.mxu0 0
        %632 = vmatmul.mubr.bf16.gmra.mrb[0].mxu0 %v573
        %v633 = vpop.f32.mrb[0].mxu0
        %v634 = vadd.f32 %v541, %v633
        %v635 = vpop.f32.mrb[0].mxu0
        %v636 = vpop.f32.mrb[0].mxu0
        %v637 = vadd.f32 %v544, %v636
        %v638 = vpop.f32.mrb[0].mxu0
        %639 = vdwg.mxu0
        %vm640 = vcmask 1042432
        %vm641 = vcmask 1046532
        %vm642 = vmor %vm640, %vm641
        %v643 = vrot.slane %v310, 5
        %v644 = vrot.slane %v643, 4
        %v645 = vrot.slane %v311, 5
        %v646 = vsel %vm642, %v644, %v645
        %v647 = vrot.slane %v312, 5
        %v648 = vrot.slane %v647, 4
        %v649 = vrot.slane %v313, 5
        %v650 = vsel %vm642, %v648, %v649
        %v651 = vrot.slane %v314, 5
        %v652 = vrot.slane %v651, 4
        %v653 = vrot.slane %v315, 5
        %v654 = vsel %vm642, %v652, %v653
        %v655 = vrot.slane %v316, 5
        %v656 = vrot.slane %v655, 4
        %v657 = vrot.slane %v317, 5
        %v658 = vsel %vm642, %v656, %v657
        %v659 = vrot.slane %v318, 5
        %v660 = vrot.slane %v659, 4
        %v661 = vrot.slane %v319, 5
        %v662 = vsel %vm642, %v660, %v661
        %v663 = vrot.slane %v320, 5
        %v664 = vrot.slane %v663, 4
        %v665 = vrot.slane %v321, 5
        %v666 = vsel %vm642, %v664, %v665
        %v667 = vrot.slane %v322, 5
        %v668 = vrot.slane %v667, 4
        %v669 = vrot.slane %v323, 5
        %v670 = vsel %vm642, %v668, %v669
        %v671 = vrot.slane %v324, 5
        %v672 = vrot.slane %v671, 4
        %v673 = vrot.slane %v325, 5
        %v674 = vsel %vm642, %v672, %v673
        %v675 = vld [vmem:[%s1 + $0x20] sm:$0xf]
        %v676 = vld [vmem:[%s1 + $0x24] sm:$0xf]
        %v677 = vld [vmem:[%s1 + $0x28] sm:$0xf]
        %v678 = vld [vmem:[%s1 + $0x2c] sm:$0xf]
        %v679 = vunpack.c.l.b16 %v646
        %v680 = vunpack.c.l.b16 %v650
        %v681 = vunpack.c.l.b16 %v654
        %v682 = vunpack.c.l.b16 %v658
        %v683 = vunpack.c.l.b16 %v662
        %v684 = vunpack.c.l.b16 %v666
        %v685 = vunpack.c.l.b16 %v670
        %v686 = vunpack.c.l.b16 %v674
        %v687 = vpack.c.b16 %v680, %v679
        %v688 = vpack.c.b16 %v682, %v681
        %v689 = vpack.c.b16 %v684, %v683
        %v690 = vpack.c.b16 %v686, %v685
        %v695 = vunpack.c.l.b16 %v675
        %v696 = vunpack.c.l.b16 %v676
        %v697 = vunpack.c.l.b16 %v677
        %v698 = vunpack.c.l.b16 %v678
        %v699 = vpack.c.b16 %v696, %v695
        %v700 = vpack.c.b16 %v698, %v697
        %v704 = vsel %vm469, %v687, 0
        %v707 = vsel %vm469, %v688, 0
        %v710 = vsel %vm469, %v689, 0
        %v713 = vsel %vm469, %v690, 0
        %715 = vmatprep.subr.bf16.mxu0 0
        %716 = vmatpush1.bf16.msra.mxu0 %v699
        %717 = vmatprep.subr.bf16.mxu0 0
        %718 = vmatpush1.bf16.msra.mxu0 %v700
        %719 = vmatprep.subr.bf16.mxu0 0
        %720 = vmatpush1.bf16.msra.mxu0 0
        %721 = vmatprep.subr.bf16.mxu0 0
        %722 = vmatpush1.bf16.msra.mxu0 0
        %723 = vmatprep.subr.bf16.mxu0 0
        %724 = vmatpush1.bf16.msra.mxu0 0
        %725 = vmatprep.subr.bf16.mxu0 0
        %726 = vmatpush1.bf16.msra.mxu0 0
        %727 = vmatprep.subr.bf16.mxu0 0
        %728 = vmatpush1.bf16.msra.mxu0 0
        %729 = vmatprep.subr.bf16.mxu0 0
        %730 = vmatpush1.bf16.msra.mxu0 0
        %731 = vmatprep.subr.bf16.mxu0 0
        %732 = vmatpush1.bf16.msra.mxu0 0
        %733 = vmatprep.subr.bf16.mxu0 0
        %734 = vmatpush1.bf16.msra.mxu0 0
        %735 = vmatprep.subr.bf16.mxu0 0
        %736 = vmatpush1.bf16.msra.mxu0 0
        %737 = vmatprep.subr.bf16.mxu0 0
        %738 = vmatpush1.bf16.msra.mxu0 0
        %739 = vmatprep.subr.bf16.mxu0 0
        %740 = vmatpush1.bf16.msra.mxu0 0
        %741 = vmatprep.subr.bf16.mxu0 0
        %742 = vmatpush1.bf16.msra.mxu0 0
        %743 = vmatprep.subr.bf16.mxu0 0
        %744 = vmatpush1.bf16.msra.mxu0 0
        %745 = vmatprep.subr.bf16.mxu0 0
        %746 = vmatpush1.bf16.msra.mxu0 0
        %747 = vmatprep.mubr.bf16.mxu0 0
        %748 = vmatmul.mubr.bf16.gmra.mrb[0].mxu0 %v704
        %v749 = vpop.f32.mrb[0].mxu0
        %v750 = vadd.f32 0.0, %v749
        %v751 = vpop.f32.mrb[0].mxu0
        %v752 = vpop.f32.mrb[0].mxu0
        %v753 = vadd.f32 0.0, %v752
        %v754 = vpop.f32.mrb[0].mxu0
        %755 = vmatprep.mubr.bf16.mxu0 0
        %756 = vmatmul.mubr.bf16.gmra.mrb[0].mxu0 %v707
        %v757 = vpop.f32.mrb[0].mxu0
        %v758 = vadd.f32 0.0, %v757
        %v759 = vpop.f32.mrb[0].mxu0
        %v760 = vpop.f32.mrb[0].mxu0
        %v761 = vadd.f32 0.0, %v760
        %v762 = vpop.f32.mrb[0].mxu0
        %763 = vmatprep.mubr.bf16.mxu0 0
        %764 = vmatmul.mubr.bf16.gmra.mrb[0].mxu0 %v710
        %v765 = vpop.f32.mrb[0].mxu0
        %v766 = vadd.f32 0.0, %v765
        %v767 = vpop.f32.mrb[0].mxu0
        %v768 = vpop.f32.mrb[0].mxu0
        %v769 = vadd.f32 0.0, %v768
        %v770 = vpop.f32.mrb[0].mxu0
        %771 = vmatprep.mubr.bf16.mxu0 0
        %772 = vmatmul.mubr.bf16.gmra.mrb[0].mxu0 %v713
        %v773 = vpop.f32.mrb[0].mxu0
        %v774 = vadd.f32 0.0, %v773
        %v775 = vpop.f32.mrb[0].mxu0
        %v776 = vpop.f32.mrb[0].mxu0
        %v777 = vadd.f32 0.0, %v776
        %v778 = vpop.f32.mrb[0].mxu0
        %779 = vdwg.mxu0
        %v780 = vadd.f32 %v610, %v750
        %v781 = vadd.f32 %v613, %v753
        %v782 = vadd.f32 %v618, %v758
        %v783 = vadd.f32 %v621, %v761
        %v784 = vadd.f32 %v626, %v766
        %v785 = vadd.f32 %v629, %v769
        %v786 = vadd.f32 %v634, %v774
        %v787 = vadd.f32 %v637, %v777
        %v788 = vld [vmem:[%s1 + $0x30] sm:$0xf]
        %v789 = vld [vmem:[%s1 + $0x34] sm:$0xf]
        %v790 = vld [vmem:[%s1 + $0x38] sm:$0xf]
        %v791 = vld [vmem:[%s1 + $0x3c] sm:$0xf]
        %v793 = vunpack.c.l.b16 %v281
        %v794 = vpack.c.b16 %v298, %v296
        %v795 = vpack.c.b16 %v302, %v300
        %v796 = vpack.c.b16 %v306, %v304
        %v797 = vpack.c.b16 %v793, %v308
        %v802 = vunpack.c.l.b16 %v788
        %v803 = vunpack.c.l.b16 %v789
        %v804 = vunpack.c.l.b16 %v790
        %v805 = vunpack.c.l.b16 %v791
        %v806 = vpack.c.b16 %v803, %v802
        %v807 = vpack.c.b16 %v805, %v804
        %v811 = vsel %vm469, %v794, 0
        %v814 = vsel %vm469, %v795, 0
        %v817 = vsel %vm469, %v796, 0
        %v820 = vsel %vm469, %v797, 0
        %822 = vmatprep.subr.bf16.mxu0 0
        %823 = vmatpush1.bf16.msra.mxu0 %v806
        %824 = vmatprep.subr.bf16.mxu0 0
        %825 = vmatpush1.bf16.msra.mxu0 %v807
        %826 = vmatprep.subr.bf16.mxu0 0
        %827 = vmatpush1.bf16.msra.mxu0 0
        %828 = vmatprep.subr.bf16.mxu0 0
        %829 = vmatpush1.bf16.msra.mxu0 0
        %830 = vmatprep.subr.bf16.mxu0 0
        %831 = vmatpush1.bf16.msra.mxu0 0
        %832 = vmatprep.subr.bf16.mxu0 0
        %833 = vmatpush1.bf16.msra.mxu0 0
        %834 = vmatprep.subr.bf16.mxu0 0
        %835 = vmatpush1.bf16.msra.mxu0 0
        %836 = vmatprep.subr.bf16.mxu0 0
        %837 = vmatpush1.bf16.msra.mxu0 0
        %838 = vmatprep.subr.bf16.mxu0 0
        %839 = vmatpush1.bf16.msra.mxu0 0
        %840 = vmatprep.subr.bf16.mxu0 0
        %841 = vmatpush1.bf16.msra.mxu0 0
        %842 = vmatprep.subr.bf16.mxu0 0
        %843 = vmatpush1.bf16.msra.mxu0 0
        %844 = vmatprep.subr.bf16.mxu0 0
        %845 = vmatpush1.bf16.msra.mxu0 0
        %846 = vmatprep.subr.bf16.mxu0 0
        %847 = vmatpush1.bf16.msra.mxu0 0
        %848 = vmatprep.subr.bf16.mxu0 0
        %849 = vmatpush1.bf16.msra.mxu0 0
        %850 = vmatprep.subr.bf16.mxu0 0
        %851 = vmatpush1.bf16.msra.mxu0 0
        %852 = vmatprep.subr.bf16.mxu0 0
        %853 = vmatpush1.bf16.msra.mxu0 0
        %854 = vmatprep.mubr.bf16.mxu0 0
        %855 = vmatmul.mubr.bf16.gmra.mrb[0].mxu0 %v811
        %v856 = vpop.f32.mrb[0].mxu0
        %v857 = vadd.f32 0.0, %v856
        %v858 = vpop.f32.mrb[0].mxu0
        %v859 = vpop.f32.mrb[0].mxu0
        %v860 = vadd.f32 0.0, %v859
        %v861 = vpop.f32.mrb[0].mxu0
        %862 = vmatprep.mubr.bf16.mxu0 0
        %863 = vmatmul.mubr.bf16.gmra.mrb[0].mxu0 %v814
        %v864 = vpop.f32.mrb[0].mxu0
        %v865 = vadd.f32 0.0, %v864
        %v866 = vpop.f32.mrb[0].mxu0
        %v867 = vpop.f32.mrb[0].mxu0
        %v868 = vadd.f32 0.0, %v867
        %v869 = vpop.f32.mrb[0].mxu0
        %870 = vmatprep.mubr.bf16.mxu0 0
        %871 = vmatmul.mubr.bf16.gmra.mrb[0].mxu0 %v817
        %v872 = vpop.f32.mrb[0].mxu0
        %v873 = vadd.f32 0.0, %v872
        %v874 = vpop.f32.mrb[0].mxu0
        %v875 = vpop.f32.mrb[0].mxu0
        %v876 = vadd.f32 0.0, %v875
        %v877 = vpop.f32.mrb[0].mxu0
        %878 = vmatprep.mubr.bf16.mxu0 0
        %879 = vmatmul.mubr.bf16.gmra.mrb[0].mxu0 %v820
        %v880 = vpop.f32.mrb[0].mxu0
        %v881 = vadd.f32 0.0, %v880
        %v882 = vpop.f32.mrb[0].mxu0
        %v883 = vpop.f32.mrb[0].mxu0
        %v884 = vadd.f32 0.0, %v883
        %v885 = vpop.f32.mrb[0].mxu0
        %886 = vdwg.mxu0
        %v887 = vadd.f32 %v780, %v857
        %v888 = vadd.f32 %v781, %v860
        %v889 = vadd.f32 %v782, %v865
        %v890 = vadd.f32 %v783, %v868
        %v891 = vadd.f32 %v784, %v873
        %v892 = vadd.f32 %v785, %v876
        %v893 = vadd.f32 %v786, %v881
        %v894 = vadd.f32 %v787, %v884
        %v895 = vunpack.c.h.b16 %v281
        %v896 = vpack.c.b16 %v793, %v793
        %v897 = vpack.c.b16 %v895, %v895
        %v899 = vshrl.u32 %v896, 16
        %v901 = vrot.slane %v899, 4
        %v902 = vshll.u32 %v896, 16
        %v904 = vrot.slane %v902, 5
        %v905 = vor.u32 %v901, %v904
        %v906 = vrot.slane %v905, 4
        %v908 = vshll.u32 %v897, 16
        %v910 = vrot.slane %v908, 5
        %v911 = vsel %vm328, %v906, %v910
        %v912 = vld [vmem:[%s1 + $0x40] sm:$0xf]
        %v913 = vld [vmem:[%s1 + $0x44] sm:$0xf]
        %v914 = vld [vmem:[%s1 + $0x48] sm:$0xf]
        %v915 = vld [vmem:[%s1 + $0x4c] sm:$0xf]
        %v916 = vunpack.c.l.b16 %v911
        %v917 = vpack.c.b16 %v447, %v446
        %v918 = vpack.c.b16 %v449, %v448
        %v919 = vpack.c.b16 %v451, %v450
        %v920 = vpack.c.b16 %v916, %v452
        %v925 = vunpack.c.l.b16 %v912
        %v926 = vunpack.c.l.b16 %v913
        %v927 = vunpack.c.l.b16 %v914
        %v928 = vunpack.c.l.b16 %v915
        %v929 = vpack.c.b16 %v926, %v925
        %v930 = vpack.c.b16 %v928, %v927
        %v934 = vsel %vm469, %v917, 0
        %v937 = vsel %vm469, %v918, 0
        %v940 = vsel %vm469, %v919, 0
        %v943 = vsel %vm469, %v920, 0
        %945 = vmatprep.subr.bf16.mxu0 0
        %946 = vmatpush1.bf16.msra.mxu0 %v929
        %947 = vmatprep.subr.bf16.mxu0 0
        %948 = vmatpush1.bf16.msra.mxu0 %v930
        %949 = vmatprep.subr.bf16.mxu0 0
        %950 = vmatpush1.bf16.msra.mxu0 0
        %951 = vmatprep.subr.bf16.mxu0 0
        %952 = vmatpush1.bf16.msra.mxu0 0
        %953 = vmatprep.subr.bf16.mxu0 0
        %954 = vmatpush1.bf16.msra.mxu0 0
        %955 = vmatprep.subr.bf16.mxu0 0
        %956 = vmatpush1.bf16.msra.mxu0 0
        %957 = vmatprep.subr.bf16.mxu0 0
        %958 = vmatpush1.bf16.msra.mxu0 0
        %959 = vmatprep.subr.bf16.mxu0 0
        %960 = vmatpush1.bf16.msra.mxu0 0
        %961 = vmatprep.subr.bf16.mxu0 0
        %962 = vmatpush1.bf16.msra.mxu0 0
        %963 = vmatprep.subr.bf16.mxu0 0
        %964 = vmatpush1.bf16.msra.mxu0 0
        %965 = vmatprep.subr.bf16.mxu0 0
        %966 = vmatpush1.bf16.msra.mxu0 0
        %967 = vmatprep.subr.bf16.mxu0 0
        %968 = vmatpush1.bf16.msra.mxu0 0
        %969 = vmatprep.subr.bf16.mxu0 0
        %970 = vmatpush1.bf16.msra.mxu0 0
        %971 = vmatprep.subr.bf16.mxu0 0
        %972 = vmatpush1.bf16.msra.mxu0 0
        %973 = vmatprep.subr.bf16.mxu0 0
        %974 = vmatpush1.bf16.msra.mxu0 0
        %975 = vmatprep.subr.bf16.mxu0 0
        %976 = vmatpush1.bf16.msra.mxu0 0
        %977 = vmatprep.mubr.bf16.mxu0 0
        %978 = vmatmul.mubr.bf16.gmra.mrb[0].mxu0 %v934
        %v979 = vpop.f32.mrb[0].mxu0
        %v980 = vadd.f32 0.0, %v979
        %v981 = vpop.f32.mrb[0].mxu0
        %v982 = vpop.f32.mrb[0].mxu0
        %v983 = vadd.f32 0.0, %v982
        %v984 = vpop.f32.mrb[0].mxu0
        %985 = vmatprep.mubr.bf16.mxu0 0
        %986 = vmatmul.mubr.bf16.gmra.mrb[0].mxu0 %v937
        %v987 = vpop.f32.mrb[0].mxu0
        %v988 = vadd.f32 0.0, %v987
        %v989 = vpop.f32.mrb[0].mxu0
        %v990 = vpop.f32.mrb[0].mxu0
        %v991 = vadd.f32 0.0, %v990
        %v992 = vpop.f32.mrb[0].mxu0
        %993 = vmatprep.mubr.bf16.mxu0 0
        %994 = vmatmul.mubr.bf16.gmra.mrb[0].mxu0 %v940
        %v995 = vpop.f32.mrb[0].mxu0
        %v996 = vadd.f32 0.0, %v995
        %v997 = vpop.f32.mrb[0].mxu0
        %v998 = vpop.f32.mrb[0].mxu0
        %v999 = vadd.f32 0.0, %v998
        %v1000 = vpop.f32.mrb[0].mxu0
        %1001 = vmatprep.mubr.bf16.mxu0 0
        %1002 = vmatmul.mubr.bf16.gmra.mrb[0].mxu0 %v943
        %v1003 = vpop.f32.mrb[0].mxu0
        %v1004 = vadd.f32 0.0, %v1003
        %v1005 = vpop.f32.mrb[0].mxu0
        %v1006 = vpop.f32.mrb[0].mxu0
        %v1007 = vadd.f32 0.0, %v1006
        %v1008 = vpop.f32.mrb[0].mxu0
        %1009 = vdwg.mxu0
        %v1010 = vadd.f32 %v887, %v980
        %v1011 = vadd.f32 %v888, %v983
        %v1012 = vadd.f32 %v889, %v988
        %v1013 = vadd.f32 %v890, %v991
        %v1014 = vadd.f32 %v891, %v996
        %v1015 = vadd.f32 %v892, %v999
        %v1016 = vadd.f32 %v893, %v1004
        %v1017 = vadd.f32 %v894, %v1007
        %v1018 = vrot.slane %v896, 5
        %v1019 = vrot.slane %v1018, 4
        %v1020 = vrot.slane %v897, 5
        %v1021 = vsel %vm642, %v1019, %v1020
        %v1022 = vld [vmem:[%s1 + $0x50] sm:$0xf]
        %v1023 = vld [vmem:[%s1 + $0x54] sm:$0xf]
        %v1024 = vld [vmem:[%s1 + $0x58] sm:$0xf]
        %v1025 = vld [vmem:[%s1 + $0x5c] sm:$0xf]
        %v1026 = vunpack.c.l.b16 %v1021
        %v1027 = vpack.c.b16 %v681, %v680
        %v1028 = vpack.c.b16 %v683, %v682
        %v1029 = vpack.c.b16 %v685, %v684
        %v1030 = vpack.c.b16 %v1026, %v686
        %v1035 = vunpack.c.l.b16 %v1022
        %v1036 = vunpack.c.l.b16 %v1023
        %v1037 = vunpack.c.l.b16 %v1024
        %v1038 = vunpack.c.l.b16 %v1025
        %v1039 = vpack.c.b16 %v1036, %v1035
        %v1040 = vpack.c.b16 %v1038, %v1037
        %v1044 = vsel %vm469, %v1027, 0
        %v1047 = vsel %vm469, %v1028, 0
        %v1050 = vsel %vm469, %v1029, 0
        %v1053 = vsel %vm469, %v1030, 0
        %1055 = vmatprep.subr.bf16.mxu0 0
        %1056 = vmatpush1.bf16.msra.mxu0 %v1039
        %1057 = vmatprep.subr.bf16.mxu0 0
        %1058 = vmatpush1.bf16.msra.mxu0 %v1040
        %1059 = vmatprep.subr.bf16.mxu0 0
        %1060 = vmatpush1.bf16.msra.mxu0 0
        %1061 = vmatprep.subr.bf16.mxu0 0
        %1062 = vmatpush1.bf16.msra.mxu0 0
        %1063 = vmatprep.subr.bf16.mxu0 0
        %1064 = vmatpush1.bf16.msra.mxu0 0
        %1065 = vmatprep.subr.bf16.mxu0 0
        %1066 = vmatpush1.bf16.msra.mxu0 0
        %1067 = vmatprep.subr.bf16.mxu0 0
        %1068 = vmatpush1.bf16.msra.mxu0 0
        %1069 = vmatprep.subr.bf16.mxu0 0
        %1070 = vmatpush1.bf16.msra.mxu0 0
        %1071 = vmatprep.subr.bf16.mxu0 0
        %1072 = vmatpush1.bf16.msra.mxu0 0
        %1073 = vmatprep.subr.bf16.mxu0 0
        %1074 = vmatpush1.bf16.msra.mxu0 0
        %1075 = vmatprep.subr.bf16.mxu0 0
        %1076 = vmatpush1.bf16.msra.mxu0 0
        %1077 = vmatprep.subr.bf16.mxu0 0
        %1078 = vmatpush1.bf16.msra.mxu0 0
        %1079 = vmatprep.subr.bf16.mxu0 0
        %1080 = vmatpush1.bf16.msra.mxu0 0
        %1081 = vmatprep.subr.bf16.mxu0 0
        %1082 = vmatpush1.bf16.msra.mxu0 0
        %1083 = vmatprep.subr.bf16.mxu0 0
        %1084 = vmatpush1.bf16.msra.mxu0 0
        %1085 = vmatprep.subr.bf16.mxu0 0
        %1086 = vmatpush1.bf16.msra.mxu0 0
        %1087 = vmatprep.mubr.bf16.mxu0 0
        %1088 = vmatmul.mubr.bf16.gmra.mrb[0].mxu0 %v1044
        %v1089 = vpop.f32.mrb[0].mxu0
        %v1090 = vadd.f32 0.0, %v1089
        %v1091 = vpop.f32.mrb[0].mxu0
        %v1092 = vpop.f32.mrb[0].mxu0
        %v1093 = vadd.f32 0.0, %v1092
        %v1094 = vpop.f32.mrb[0].mxu0
        %1095 = vmatprep.mubr.bf16.mxu0 0
        %1096 = vmatmul.mubr.bf16.gmra.mrb[0].mxu0 %v1047
        %v1097 = vpop.f32.mrb[0].mxu0
        %v1098 = vadd.f32 0.0, %v1097
        %v1099 = vpop.f32.mrb[0].mxu0
        %v1100 = vpop.f32.mrb[0].mxu0
        %v1101 = vadd.f32 0.0, %v1100
        %v1102 = vpop.f32.mrb[0].mxu0
        %1103 = vmatprep.mubr.bf16.mxu0 0
        %1104 = vmatmul.mubr.bf16.gmra.mrb[0].mxu0 %v1050
        %v1105 = vpop.f32.mrb[0].mxu0
        %v1106 = vadd.f32 0.0, %v1105
        %v1107 = vpop.f32.mrb[0].mxu0
        %v1108 = vpop.f32.mrb[0].mxu0
        %v1109 = vadd.f32 0.0, %v1108
        %v1110 = vpop.f32.mrb[0].mxu0
        %1111 = vmatprep.mubr.bf16.mxu0 0
        %1112 = vmatmul.mubr.bf16.gmra.mrb[0].mxu0 %v1053
        %v1113 = vpop.f32.mrb[0].mxu0
        %v1114 = vadd.f32 0.0, %v1113
        %v1115 = vpop.f32.mrb[0].mxu0
        %v1116 = vpop.f32.mrb[0].mxu0
        %v1117 = vadd.f32 0.0, %v1116
        %v1118 = vpop.f32.mrb[0].mxu0
        %1119 = vdwg.mxu0
        %v1120 = vadd.f32 %v1010, %v1090
        %v1121 = vadd.f32 %v1011, %v1093
        %v1122 = vadd.f32 %v1012, %v1098
        %v1123 = vadd.f32 %v1013, %v1101
        %v1124 = vadd.f32 %v1014, %v1106
        %v1125 = vadd.f32 %v1015, %v1109
        %v1126 = vadd.f32 %v1016, %v1114
        %v1127 = vadd.f32 %v1017, %v1117
        %v1128 = vld [vmem:[%s1 + $0x60] sm:$0xf]
        %v1129 = vld [vmem:[%s1 + $0x64] sm:$0xf]
        %v1130 = vld [vmem:[%s1 + $0x68] sm:$0xf]
        %v1131 = vld [vmem:[%s1 + $0x6c] sm:$0xf]
        %v1132 = vpack.c.b16 %v294, %v793
        %v1137 = vunpack.c.l.b16 %v1128
        %v1138 = vunpack.c.l.b16 %v1129
        %v1139 = vunpack.c.l.b16 %v1130
        %v1140 = vunpack.c.l.b16 %v1131
        %v1141 = vpack.c.b16 %v1138, %v1137
        %v1142 = vpack.c.b16 %v1140, %v1139
        %v1146 = vsel %vm469, %v1132, 0
        %1148 = vmatprep.subr.bf16.mxu0 0
        %1149 = vmatpush1.bf16.msra.mxu0 %v1141
        %1150 = vmatprep.subr.bf16.mxu0 0
        %1151 = vmatpush1.bf16.msra.mxu0 %v1142
        %1152 = vmatprep.subr.bf16.mxu0 0
        %1153 = vmatpush1.bf16.msra.mxu0 0
        %1154 = vmatprep.subr.bf16.mxu0 0
        %1155 = vmatpush1.bf16.msra.mxu0 0
        %1156 = vmatprep.subr.bf16.mxu0 0
        %1157 = vmatpush1.bf16.msra.mxu0 0
        %1158 = vmatprep.subr.bf16.mxu0 0
        %1159 = vmatpush1.bf16.msra.mxu0 0
        %1160 = vmatprep.subr.bf16.mxu0 0
        %1161 = vmatpush1.bf16.msra.mxu0 0
        %1162 = vmatprep.subr.bf16.mxu0 0
        %1163 = vmatpush1.bf16.msra.mxu0 0
        %1164 = vmatprep.subr.bf16.mxu0 0
        %1165 = vmatpush1.bf16.msra.mxu0 0
        %1166 = vmatprep.subr.bf16.mxu0 0
        %1167 = vmatpush1.bf16.msra.mxu0 0
        %1168 = vmatprep.subr.bf16.mxu0 0
        %1169 = vmatpush1.bf16.msra.mxu0 0
        %1170 = vmatprep.subr.bf16.mxu0 0
        %1171 = vmatpush1.bf16.msra.mxu0 0
        %1172 = vmatprep.subr.bf16.mxu0 0
        %1173 = vmatpush1.bf16.msra.mxu0 0
        %1174 = vmatprep.subr.bf16.mxu0 0
        %1175 = vmatpush1.bf16.msra.mxu0 0
        %1176 = vmatprep.subr.bf16.mxu0 0
        %1177 = vmatpush1.bf16.msra.mxu0 0
        %1178 = vmatprep.subr.bf16.mxu0 0
        %1179 = vmatpush1.bf16.msra.mxu0 0
        %1180 = vmatprep.mubr.bf16.mxu0 0
        %1181 = vmatmul.mubr.bf16.gmra.mrb[0].mxu0 %v567
        %v1182 = vpop.f32.mrb[0].mxu0
        %v1183 = vadd.f32 0.0, %v1182
        %v1184 = vpop.f32.mrb[0].mxu0
        %v1185 = vpop.f32.mrb[0].mxu0
        %v1186 = vadd.f32 0.0, %v1185
        %v1187 = vpop.f32.mrb[0].mxu0
        %1188 = vmatprep.mubr.bf16.mxu0 0
        %1189 = vmatmul.mubr.bf16.gmra.mrb[0].mxu0 %v570
        %v1190 = vpop.f32.mrb[0].mxu0
        %v1191 = vadd.f32 0.0, %v1190
        %v1192 = vpop.f32.mrb[0].mxu0
        %v1193 = vpop.f32.mrb[0].mxu0
        %v1194 = vadd.f32 0.0, %v1193
        %v1195 = vpop.f32.mrb[0].mxu0
        %1196 = vmatprep.mubr.bf16.mxu0 0
        %1197 = vmatmul.mubr.bf16.gmra.mrb[0].mxu0 %v573
        %v1198 = vpop.f32.mrb[0].mxu0
        %v1199 = vadd.f32 0.0, %v1198
        %v1200 = vpop.f32.mrb[0].mxu0
        %v1201 = vpop.f32.mrb[0].mxu0
        %v1202 = vadd.f32 0.0, %v1201
        %v1203 = vpop.f32.mrb[0].mxu0
        %1204 = vmatprep.mubr.bf16.mxu0 0
        %1205 = vmatmul.mubr.bf16.gmra.mrb[0].mxu0 %v1146
        %v1206 = vpop.f32.mrb[0].mxu0
        %v1207 = vadd.f32 0.0, %v1206
        %v1208 = vpop.f32.mrb[0].mxu0
        %v1209 = vpop.f32.mrb[0].mxu0
        %v1210 = vadd.f32 0.0, %v1209
        %v1211 = vpop.f32.mrb[0].mxu0
        %1212 = vdwg.mxu0
        %v1213 = vadd.f32 %v1120, %v1183
        %v1214 = vadd.f32 %v1121, %v1186
        %v1215 = vadd.f32 %v1122, %v1191
        %v1216 = vadd.f32 %v1123, %v1194
        %v1217 = vadd.f32 %v1124, %v1199
        %v1218 = vadd.f32 %v1125, %v1202
        %v1219 = vadd.f32 %v1126, %v1207
        %v1220 = vadd.f32 %v1127, %v1210
        %v1221 = vld [vmem:[%s1 + $0x70] sm:$0xf]
        %v1222 = vld [vmem:[%s1 + $0x74] sm:$0xf]
        %v1223 = vld [vmem:[%s1 + $0x78] sm:$0xf]
        %v1224 = vld [vmem:[%s1 + $0x7c] sm:$0xf]
        %v1225 = vpack.c.b16 %v445, %v916
        %v1230 = vunpack.c.l.b16 %v1221
        %v1231 = vunpack.c.l.b16 %v1222
        %v1232 = vunpack.c.l.b16 %v1223
        %v1233 = vunpack.c.l.b16 %v1224
        %v1234 = vpack.c.b16 %v1231, %v1230
        %v1235 = vpack.c.b16 %v1233, %v1232
        %v1239 = vsel %vm469, %v1225, 0
        %1241 = vmatprep.subr.bf16.mxu0 0
        %1242 = vmatpush1.bf16.msra.mxu0 %v1234
        %1243 = vmatprep.subr.bf16.mxu0 0
        %1244 = vmatpush1.bf16.msra.mxu0 %v1235
        %1245 = vmatprep.subr.bf16.mxu0 0
        %1246 = vmatpush1.bf16.msra.mxu0 0
        %1247 = vmatprep.subr.bf16.mxu0 0
        %1248 = vmatpush1.bf16.msra.mxu0 0
        %1249 = vmatprep.subr.bf16.mxu0 0
        %1250 = vmatpush1.bf16.msra.mxu0 0
        %1251 = vmatprep.subr.bf16.mxu0 0
        %1252 = vmatpush1.bf16.msra.mxu0 0
        %1253 = vmatprep.subr.bf16.mxu0 0
        %1254 = vmatpush1.bf16.msra.mxu0 0
        %1255 = vmatprep.subr.bf16.mxu0 0
        %1256 = vmatpush1.bf16.msra.mxu0 0
        %1257 = vmatprep.subr.bf16.mxu0 0
        %1258 = vmatpush1.bf16.msra.mxu0 0
        %1259 = vmatprep.subr.bf16.mxu0 0
        %1260 = vmatpush1.bf16.msra.mxu0 0
        %1261 = vmatprep.subr.bf16.mxu0 0
        %1262 = vmatpush1.bf16.msra.mxu0 0
        %1263 = vmatprep.subr.bf16.mxu0 0
        %1264 = vmatpush1.bf16.msra.mxu0 0
        %1265 = vmatprep.subr.bf16.mxu0 0
        %1266 = vmatpush1.bf16.msra.mxu0 0
        %1267 = vmatprep.subr.bf16.mxu0 0
        %1268 = vmatpush1.bf16.msra.mxu0 0
        %1269 = vmatprep.subr.bf16.mxu0 0
        %1270 = vmatpush1.bf16.msra.mxu0 0
        %1271 = vmatprep.subr.bf16.mxu0 0
        %1272 = vmatpush1.bf16.msra.mxu0 0
        %1273 = vmatprep.mubr.bf16.mxu0 0
        %1274 = vmatmul.mubr.bf16.gmra.mrb[0].mxu0 %v474
        %v1275 = vpop.f32.mrb[0].mxu0
        %v1276 = vadd.f32 0.0, %v1275
        %v1277 = vpop.f32.mrb[0].mxu0
        %v1278 = vpop.f32.mrb[0].mxu0
        %v1279 = vadd.f32 0.0, %v1278
        %v1280 = vpop.f32.mrb[0].mxu0
        %1281 = vmatprep.mubr.bf16.mxu0 0
        %1282 = vmatmul.mubr.bf16.gmra.mrb[0].mxu0 %v477
        %v1283 = vpop.f32.mrb[0].mxu0
        %v1284 = vadd.f32 0.0, %v1283
        %v1285 = vpop.f32.mrb[0].mxu0
        %v1286 = vpop.f32.mrb[0].mxu0
        %v1287 = vadd.f32 0.0, %v1286
        %v1288 = vpop.f32.mrb[0].mxu0
        %1289 = vmatprep.mubr.bf16.mxu0 0
        %1290 = vmatmul.mubr.bf16.gmra.mrb[0].mxu0 %v480
        %v1291 = vpop.f32.mrb[0].mxu0
        %v1292 = vadd.f32 0.0, %v1291
        %v1293 = vpop.f32.mrb[0].mxu0
        %v1294 = vpop.f32.mrb[0].mxu0
        %v1295 = vadd.f32 0.0, %v1294
        %v1296 = vpop.f32.mrb[0].mxu0
        %1297 = vmatprep.mubr.bf16.mxu0 0
        %1298 = vmatmul.mubr.bf16.gmra.mrb[0].mxu0 %v1239
        %v1299 = vpop.f32.mrb[0].mxu0
        %v1300 = vadd.f32 0.0, %v1299
        %v1301 = vpop.f32.mrb[0].mxu0
        %v1302 = vpop.f32.mrb[0].mxu0
        %v1303 = vadd.f32 0.0, %v1302
        %v1304 = vpop.f32.mrb[0].mxu0
        %1305 = vdwg.mxu0
        %v1306 = vadd.f32 %v1213, %v1276
        %v1307 = vadd.f32 %v1214, %v1279
        %v1308 = vadd.f32 %v1215, %v1284
        %v1309 = vadd.f32 %v1216, %v1287
        %v1310 = vadd.f32 %v1217, %v1292
        %v1311 = vadd.f32 %v1218, %v1295
        %v1312 = vadd.f32 %v1219, %v1300
        %v1313 = vadd.f32 %v1220, %v1303
        %v1314 = vld [vmem:[%s1 + $0x80] sm:$0xf]
        %v1315 = vld [vmem:[%s1 + $0x84] sm:$0xf]
        %v1316 = vld [vmem:[%s1 + $0x88] sm:$0xf]
        %v1317 = vld [vmem:[%s1 + $0x8c] sm:$0xf]
        %v1318 = vpack.c.b16 %v679, %v1026
        %v1323 = vunpack.c.l.b16 %v1314
        %v1324 = vunpack.c.l.b16 %v1315
        %v1325 = vunpack.c.l.b16 %v1316
        %v1326 = vunpack.c.l.b16 %v1317
        %v1327 = vpack.c.b16 %v1324, %v1323
        %v1328 = vpack.c.b16 %v1326, %v1325
        %v1332 = vsel %vm469, %v1318, 0
        %1334 = vmatprep.subr.bf16.mxu0 0
        %1335 = vmatpush1.bf16.msra.mxu0 %v1327
        %1336 = vmatprep.subr.bf16.mxu0 0
        %1337 = vmatpush1.bf16.msra.mxu0 %v1328
        %1338 = vmatprep.subr.bf16.mxu0 0
        %1339 = vmatpush1.bf16.msra.mxu0 0
        %1340 = vmatprep.subr.bf16.mxu0 0
        %1341 = vmatpush1.bf16.msra.mxu0 0
        %1342 = vmatprep.subr.bf16.mxu0 0
        %1343 = vmatpush1.bf16.msra.mxu0 0
        %1344 = vmatprep.subr.bf16.mxu0 0
        %1345 = vmatpush1.bf16.msra.mxu0 0
        %1346 = vmatprep.subr.bf16.mxu0 0
        %1347 = vmatpush1.bf16.msra.mxu0 0
        %1348 = vmatprep.subr.bf16.mxu0 0
        %1349 = vmatpush1.bf16.msra.mxu0 0
        %1350 = vmatprep.subr.bf16.mxu0 0
        %1351 = vmatpush1.bf16.msra.mxu0 0
        %1352 = vmatprep.subr.bf16.mxu0 0
        %1353 = vmatpush1.bf16.msra.mxu0 0
        %1354 = vmatprep.subr.bf16.mxu0 0
        %1355 = vmatpush1.bf16.msra.mxu0 0
        %1356 = vmatprep.subr.bf16.mxu0 0
        %1357 = vmatpush1.bf16.msra.mxu0 0
        %1358 = vmatprep.subr.bf16.mxu0 0
        %1359 = vmatpush1.bf16.msra.mxu0 0
        %1360 = vmatprep.subr.bf16.mxu0 0
        %1361 = vmatpush1.bf16.msra.mxu0 0
        %1362 = vmatprep.subr.bf16.mxu0 0
        %1363 = vmatpush1.bf16.msra.mxu0 0
        %1364 = vmatprep.subr.bf16.mxu0 0
        %1365 = vmatpush1.bf16.msra.mxu0 0
        %1366 = vmatprep.mubr.bf16.mxu0 0
        %1367 = vmatmul.mubr.bf16.gmra.mrb[0].mxu0 %v707
        %v1368 = vpop.f32.mrb[0].mxu0
        %v1369 = vadd.f32 0.0, %v1368
        %v1370 = vpop.f32.mrb[0].mxu0
        %v1371 = vpop.f32.mrb[0].mxu0
        %v1372 = vadd.f32 0.0, %v1371
        %v1373 = vpop.f32.mrb[0].mxu0
        %1374 = vmatprep.mubr.bf16.mxu0 0
        %1375 = vmatmul.mubr.bf16.gmra.mrb[0].mxu0 %v710
        %v1376 = vpop.f32.mrb[0].mxu0
        %v1377 = vadd.f32 0.0, %v1376
        %v1378 = vpop.f32.mrb[0].mxu0
        %v1379 = vpop.f32.mrb[0].mxu0
        %v1380 = vadd.f32 0.0, %v1379
        %v1381 = vpop.f32.mrb[0].mxu0
        %1382 = vmatprep.mubr.bf16.mxu0 0
        %1383 = vmatmul.mubr.bf16.gmra.mrb[0].mxu0 %v713
        %v1384 = vpop.f32.mrb[0].mxu0
        %v1385 = vadd.f32 0.0, %v1384
        %v1386 = vpop.f32.mrb[0].mxu0
        %v1387 = vpop.f32.mrb[0].mxu0
        %v1388 = vadd.f32 0.0, %v1387
        %v1389 = vpop.f32.mrb[0].mxu0
        %1390 = vmatprep.mubr.bf16.mxu0 0
        %1391 = vmatmul.mubr.bf16.gmra.mrb[0].mxu0 %v1332
        %v1392 = vpop.f32.mrb[0].mxu0
        %v1393 = vadd.f32 0.0, %v1392
        %v1394 = vpop.f32.mrb[0].mxu0
        %v1395 = vpop.f32.mrb[0].mxu0
        %v1396 = vadd.f32 0.0, %v1395
        %v1397 = vpop.f32.mrb[0].mxu0
        %1398 = vdwg.mxu0
        %v1399 = vadd.f32 %v1306, %v1369
        %v1400 = vadd.f32 %v1307, %v1372
        %v1401 = vadd.f32 %v1308, %v1377
        %v1402 = vadd.f32 %v1309, %v1380
        %v1403 = vadd.f32 %v1310, %v1385
        %v1404 = vadd.f32 %v1311, %v1388
        %v1405 = vadd.f32 %v1312, %v1393
        %v1406 = vadd.f32 %v1313, %v1396
        %v1407 = vld [vmem:[%s2] sm:$0x1]
        %v1409 = vlaneseq
        %v1410 = vshrl.u32 %v1409, 7
        %v1411 = vsub.s32 0, %v1410
        %v1412 = vrot.slane %v1407, %v1411
        %v1414 = vadd.f32 %v1399, %v1412
        %v1415 = vadd.f32 %v1400, %v1412
        %v1416 = vadd.f32 %v1401, %v1412
        %v1417 = vadd.f32 %v1402, %v1412
        %v1418 = vadd.f32 %v1403, %v1412
        %v1419 = vadd.f32 %v1404, %v1412
        %v1420 = vadd.f32 %v1405, %v1412
        %v1421 = vadd.f32 %v1406, %v1412
        %vm1422 = vcmask 523264
        %1423 = vst.msk [vmem:[%s163] sm:$0xff] %vm1422, %v1414
        %1424 = vst.msk [vmem:[%s163 + $0x8] sm:$0xff] %vm1422, %v1415
        %1425 = vst.msk [vmem:[%s163 + $0x10] sm:$0xff] %vm1422, %v1416
        %1426 = vst.msk [vmem:[%s163 + $0x18] sm:$0xff] %vm1422, %v1417
        %1427 = vst.msk [vmem:[%s163 + $0x20] sm:$0xff] %vm1422, %v1418
        %1428 = vst.msk [vmem:[%s163 + $0x28] sm:$0xff] %vm1422, %v1419
        %1429 = vst.msk [vmem:[%s163 + $0x30] sm:$0xff] %vm1422, %v1420
        %1430 = vst.msk [vmem:[%s163 + $0x38] sm:$0xff] %vm1422, %v1421
        %s1431 = sand.u32 %s93, 1
        %s1432 = scalar_lea.sflag [#allocation3], %s1431
        %s1433 = sand.u32 %s93, 1
        %s1434 = smul.addr %s1433, 64
        %s1435 = scalar_lea.vmem [#allocation2], %s1434
        // Predicated region
        $region33: #{tpu_custom_call.1} parent=31 // pred_check
          %p1436 = pneg %p103
        $region34: #{tpu_custom_call.1} parent=31 // pred_check_branch
          %1438 = sbr.rel (%p1436) target = $region36
        $region35: #{tpu_custom_call.1} parent=31 // pred_region
          %s1440 = ssub.s32 1024, 1024
          %1441 = vsyncadd %s1432, %s1440
          %s1442 = smul.addr %s17, 8
          %s1443 = smul.addr %s1442, 128
          %s1444 = scalar_lea.hbm %s3, %s1443
          %s1445 = sshll.u32 %s1435, 4
          %s1446 = int_to_ptr.vmem [resolvable:$true] %s1445
          %1451 = dma.vmem_to_hbm [thread:$0]  %s1446, 1024, %s1444, %s1432, 128, 128, 8
        $region36: #{tpu_custom_call.1} parent=31 // pred_fallthru
          _
      $region32: #{tpu_custom_call.1} parent=5 // pred_fallthru
        _
      %p1452 = scmp.le.s32.totalorder 2, %s12
      // Predicated region
      $region37: #{tpu_custom_call.1} parent=5 // pred_check
        %p1453 = pneg %p1452
      $region38: #{tpu_custom_call.1} parent=5 // pred_check_branch
        %1455 = sbr.rel (%p1453) target = $region40
      $region39: #{tpu_custom_call.1} parent=5 // pred_region
        %s1456 = ssub.s32 %s12, 2
        // Predicated region
        $region41: #{tpu_custom_call.1} parent=39 // pred_check
          %p1457 = pneg %p109
        $region42: #{tpu_custom_call.1} parent=39 // pred_check_branch
          %1459 = sbr.rel (%p1457) target = $region44
        $region43: #{tpu_custom_call.1} parent=39 // pred_region
          %s1460 = sand.u32 %s94, 1
          %s1461 = scalar_lea.sflag [#allocation3], %s1460
          %s1462 = sand.u32 %s94, 1
          %s1463 = smul.addr %s1462, 64
          %s1464 = scalar_lea.vmem [#allocation2], %s1463
          %1465 = dma.done %s1461, 1024
        $region44: #{tpu_custom_call.1} parent=39 // pred_fallthru
          _
      $region40: #{tpu_custom_call.1} parent=5 // pred_fallthru
        _
    $region6: #{tpu_custom_call.1} parent=1 // loop_footer
      %s16 = sadd.s32 1, %s12
    $region7: #{tpu_custom_call.1} parent=1 // loop_footer_branch
      %11 = sbr.rel target = $region3
    $region8: #{tpu_custom_call.1} parent=1 // loop_exit
      _
    %1466 = vsyncpa [#allocation3], 1
    %s1467 = scalar_lea.sflag [#allocation3], 1
    %1468 = vsyncpa %s1467, 1

</llo_original>
